<compile_context>
chip_gen: v7x
topology: tpu7x:2x2x1
jax: 0.10.0
libtpu: 0.0.40
codegen_flags: <defaults>
</compile_context>

<pallas_src>
import math
import functools

import jax
import jax.numpy as jnp
from jax.experimental import pallas as pl
from jax.experimental.pallas import tpu as pltpu


# --------------------------- attention kernel ----------------------------------

def _rel_attn_kernel(x_ref, w_ref, wt_ref, temb_ref, emb_ref, bias_ref,
                     sel_ref, pat_ref, exp_ref, o_ref, trows_sc, *, inv_scale):
    # x_ref    : (1, N, d)      bf16 flattened input rows (resident across heads)
    # w_ref    : (1, 3, d, dh)  bf16 per-head q/k/v weight slabs (already transposed)
    # wt_ref   : (3, d, dh)     bf16 time q/k/v weights (constant, resident)
    # temb_ref : (1, l, d)      bf16 time embeddings
    # emb_ref  : (1, l*l, dh)   bf16 compact relative-position embeddings
    # bias_ref : (1, 1, l*l)    f32 additive mask bias (0 visible / -1e9 masked)
    # sel_ref  : (N, l)         bf16 one-hot: row i belongs to chunk i//n
    # pat_ref  : (N, l*l)       f32 0/1: flat idx (lq,lk) matches row's query chunk
    # exp_ref  : (l*l, N)       bf16 one-hot: flat idx (lq,lk) feeds key column j (j//n==lk)
    # o_ref    : (1, 1, N, dh)  f32 per-head output
    # trows_sc : (3, N, dh)     f32 per-batch time rows (persistent scratch)
    f32, bf16 = jnp.float32, jnp.bfloat16
    hi = pl.program_id(1)

    # ---- head-invariant, per-batch setup (h axis is "arbitrary": runs once per batch,
    #      scratch stays live for the remaining h-1 heads) ----
    @pl.when(hi == 0)
    def _():
        temb = temb_ref[0]                                       # [l, d]
        sel = sel_ref[...]                                       # [N, l] one-hot
        for j in range(3):                                       # q_t, k_t, v_t
            tproj = jnp.dot(temb, wt_ref[j], preferred_element_type=f32)       # [l, dh]
            trows_sc[j] = jnp.dot(sel, tproj.astype(bf16),
                                  preferred_element_type=f32)                  # [N, dh]

    # ---- fused per-head projection + time add (MXU, bf16 operands, f32 accumulate);
    #      1/sqrt(dim) folded into q ----
    x = x_ref[0]                                                 # [N, d] bf16
    q = ((jnp.dot(x, w_ref[0, 0], preferred_element_type=f32) + trows_sc[0])
         * inv_scale).astype(bf16)                               # [N, dh]
    k = (jnp.dot(x, w_ref[0, 1], preferred_element_type=f32) + trows_sc[1]).astype(bf16)
    v = (jnp.dot(x, w_ref[0, 2], preferred_element_type=f32) + trows_sc[2]).astype(bf16)

    dn = (((1,), (1,)), ((), ()))                                # contract last dims: A @ B^T

    # Content scores (already scaled through q).
    qk = jax.lax.dot_general(q, k, dn, preferred_element_type=f32)             # [N, N]

    # Relative-position scores on the compact chunk axis with the mask folded in as an
    # additive -1e9 bias, then a single one-hot expansion along the key axis.
    s = jax.lax.dot_general(q, emb_ref[0], dn, preferred_element_type=f32)     # [N, l*l]
    s = (s + bias_ref[0]) * pat_ref[...]           # keep only this row's query chunk
    qr = jnp.dot(s.astype(bf16), exp_ref[...], preferred_element_type=f32)     # [N, N]

    # Softmax over keys (fp32 element-wise math; reciprocal on the EUP).
    scores = qk + qr
    scores = scores - jnp.max(scores, axis=-1, keepdims=True)
    p = jnp.exp(scores)
    attn = p * pl.reciprocal(jnp.sum(p, axis=-1, keepdims=True), approx=True)
    # TODO(synk): eval-mode only; training-time dropout omitted.

    o_ref[0, 0] = jnp.dot(attn.astype(bf16), v, preferred_element_type=f32)


def _vmem_limit_bytes():
    # ~75% of physical VMEM: ~96 MiB on 128 MiB parts (v5e/v6e), ~48 MiB on v7x.
    try:
        cap = int(pltpu.get_tpu_info().vmem_capacity_bytes)
        return (cap * 3) // 4
    except Exception:
        return None   # fall back to the compiler's default scoped-VMEM limit


def rel_attn_pallas(x, w_qkv_heads, w_time, temb, emb, bias, sel_nl, pat, exp_mat,
                    *, inv_scale):
    b, N, d = x.shape
    h = w_qkv_heads.shape[0]
    dh = w_qkv_heads.shape[3]
    l = sel_nl.shape[1]
    ll = l * l
    kernel = functools.partial(_rel_attn_kernel, inv_scale=inv_scale)
    return pl.pallas_call(
        kernel,
        out_shape=jax.ShapeDtypeStruct((b, h, N, dh), jnp.float32),
        grid=(b, h),
        in_specs=[
            pl.BlockSpec((1, N, d),     lambda bi, hi: (bi, 0, 0)),      # x (resident over h)
            pl.BlockSpec((1, 3, d, dh), lambda bi, hi: (hi, 0, 0, 0)),   # per-head qkv weights
            pl.BlockSpec((3, d, dh),    lambda bi, hi: (0, 0, 0)),       # time weights (resident)
            pl.BlockSpec((1, l, d),     lambda bi, hi: (bi, 0, 0)),      # time embeddings
            pl.BlockSpec((1, ll, dh),   lambda bi, hi: (bi, 0, 0)),      # compact rel-pos emb
            pl.BlockSpec((1, 1, ll),    lambda bi, hi: (bi, 0, 0)),      # compact mask bias
            pl.BlockSpec((N, l),        lambda bi, hi: (0, 0)),          # one-hot chunk -> rows
            pl.BlockSpec((N, ll),       lambda bi, hi: (0, 0)),          # row-chunk pattern
            pl.BlockSpec((ll, N),       lambda bi, hi: (0, 0)),          # one-hot chunk -> key cols
        ],
        out_specs=pl.BlockSpec((1, 1, N, dh), lambda bi, hi: (bi, hi, 0, 0)),
        scratch_shapes=[pltpu.VMEM((3, N, dh), jnp.float32)],
        compiler_params=pltpu.CompilerParams(
            dimension_semantics=("parallel", "arbitrary"),
            vmem_limit_bytes=_vmem_limit_bytes()),
    )(x, w_qkv_heads, w_time, temb, emb, bias, sel_nl, pat, exp_mat)


# --------------------------- module wrapper -----------------------------------

class RelativeMultiHeadAttentionPallas:
    def __init__(self, dim, num_heads, dropout, max_relative_position, *, key):
        assert dim % num_heads == 0, "dim must be divisible by num_heads"
        self.dim = dim
        self.num_heads = num_heads
        self.head_dim = dim // num_heads
        self.max_relative_position = max_relative_position
        self.scale = math.sqrt(dim)

        k1, k2, k3 = jax.random.split(key, 3)
        bound = 1.0 / math.sqrt(dim)
        # nn.Linear(dim, 3*dim, bias=False)  weight: [3*dim, dim]
        self.w_qkv = jax.random.uniform(k1, (3 * dim, dim), jnp.float32, -bound, bound)
        # nn.Linear(dim, 3*head_dim, bias=False) weight: [3*head_dim, dim]
        self.w_time = jax.random.uniform(k2, (3 * self.head_dim, dim), jnp.float32,
                                         -bound, bound)
        # xavier_uniform for the relative-position table [2*max+1, head_dim]
        rows = 2 * max_relative_position + 1
        bx = math.sqrt(6.0 / (rows + self.head_dim))
        self.table = jax.random.uniform(k3, (rows, self.head_dim), jnp.float32, -bx, bx)

        h, dh, d = num_heads, self.head_dim, dim
        # Per-head weight slabs [h, 3, d, dh] (already transposed, bf16):
        #   w_qkv_heads[hi, j] = W_qkv[j*dim + hi*dh : j*dim + (hi+1)*dh, :].T
        self.w_qkv_heads = jnp.transpose(self.w_qkv.reshape(3, h, dh, d),
                                         (1, 0, 3, 2)).astype(jnp.bfloat16)
        # Time weights [3, d, dh] (transposed, bf16): w_time_h[j] = W_time[j*dh:(j+1)*dh].T
        self.w_time_h = jnp.transpose(self.w_time.reshape(3, dh, d),
                                      (0, 2, 1)).astype(jnp.bfloat16)

    def __call__(self, x, time_embeddings, pos, mask=None):
        b, l, n, d = x.shape
        h, dh = self.num_heads, self.head_dim
        N = l * n

        x_bf = x.reshape(b, N, d).astype(jnp.bfloat16)
        temb_bf = time_embeddings.astype(jnp.bfloat16)

        # relative-position table lookup (tiny gather, XLA glue), flattened [b, l*l, dh]
        idx = jnp.clip(pos, -self.max_relative_position, self.max_relative_position)
        idx = idx + self.max_relative_position
        emb = self.table[idx].reshape(b, l * l, dh).astype(jnp.bfloat16)

        # compact additive mask bias: 0 where visible, -1e9 where masked
        if mask is None:
            bias = jnp.zeros((b, 1, l * l), jnp.float32)
        else:
            bias = jnp.where(mask.reshape(b, 1, l * l) != 0,
                             jnp.float32(0.0), jnp.float32(-1e9))

        # chunk selectors (constants; fetched once and VMEM-resident across the grid)
        row_chunk = jnp.arange(N, dtype=jnp.int32) // n                 # chunk of row i
        key_chunk = jnp.arange(N, dtype=jnp.int32) // n                 # chunk of key j
        cq = jnp.arange(l * l, dtype=jnp.int32) // l                    # query chunk of flat idx
        ck = jnp.arange(l * l, dtype=jnp.int32) % l                     # key chunk of flat idx
        sel_nl = (row_chunk[:, None] ==
                  jnp.arange(l, dtype=jnp.int32)[None, :]).astype(jnp.bfloat16)   # [N, l]
        pat = (row_chunk[:, None] == cq[None, :]).astype(jnp.float32)              # [N, l*l]
        exp_mat = (ck[:, None] == key_chunk[None, :]).astype(jnp.bfloat16)          # [l*l, N]

        out = rel_attn_pallas(x_bf, self.w_qkv_heads, self.w_time_h, temb_bf,
                              emb, bias, sel_nl, pat, exp_mat,
                              inv_scale=1.0 / self.scale)               # [b, h, N, dh]
        # 'b h (l n) dh -> b l n (h dh)'
        return out.transpose(0, 2, 1, 3).reshape(b, l, n, d)


# --------------------------- pure-JAX reference -------------------------------

def reference_forward(mod, x, time_emb, pos, mask):
    b, l, n, d = x.shape
    h, dh = mod.num_heads, mod.head_dim
    N = l * n

    qkv = x @ mod.w_qkv.T
    q, k, v = jnp.split(qkv, 3, -1)

    def rh(t):
        return t.reshape(b, l, n, h, dh).transpose(0, 3, 1, 2, 4)

    q, k, v = rh(q), rh(k), rh(v)
    tqkv = (time_emb @ mod.w_time.T)[:, None, :, None, :]    # [b,1,l,1,3dh]
    qt, kt, vt = jnp.split(tqkv, 3, -1)
    q = (q + qt).reshape(b, h, N, dh)
    k = (k + kt).reshape(b, h, N, dh)
    v = (v + vt).reshape(b, h, N, dh)

    qk_t = q @ jnp.swapaxes(k, -1, -2)

    # literal translation of RelativePosition.forward
    idx = jnp.clip(pos, -mod.max_relative_position, mod.max_relative_position)
    idx = idx + mod.max_relative_position
    emb = mod.table[idx]                                      # [b,l,l,dh]
    x_chunked = q.reshape(b, h, l, n, dh).transpose(0, 1, 3, 2, 4)     # b h n l d
    emb_t = jnp.transpose(emb, (0, 1, 3, 2))                  # [b,l,dh,l]
    prod = jnp.matmul(x_chunked[..., None, :], emb_t[:, None, None])   # [b,h,n,l,1,l]
    prod = prod[..., 0, :]                                    # [b,h,n,l,l]
    prod = jnp.transpose(prod, (0, 1, 3, 2, 4))               # [b,h,lq,n,lk]
    prod = jnp.broadcast_to(prod[..., None], (b, h, l, n, l, n))
    qr = prod.reshape(b, h, N, N)

    attn = (qk_t + qr) / mod.scale
    exp_mask = jnp.broadcast_to(mask[:, :, None, :, None], (b, l, n, l, n)).reshape(b, N, N)
    exp_mask = jnp.broadcast_to(exp_mask[:, None], (b, h, N, N))
    attn = jnp.where(exp_mask == 0, jnp.float32(jnp.finfo(jnp.bfloat16).min), attn)
    attn = jax.nn.softmax(attn, axis=-1)
    out = attn @ v
    out = out.reshape(b, h, l, n, dh).transpose(0, 2, 3, 1, 4).reshape(b, l, n, d)
    return out


# ------------------------------- main ------------------------------------------

if __name__ == "__main__":
    key = jax.random.PRNGKey(0)
    kp, kx, kt, kpos = jax.random.split(key, 4)

    b, l, n, dim, heads, max_rel = 2, 4, 2, 32, 4, 3
    mod = RelativeMultiHeadAttentionPallas(dim, heads, dropout=0.0,
                                           max_relative_position=max_rel, key=kp)

    x = jax.random.normal(kx, (b, l, n, dim), jnp.float32)
    time_emb = jax.random.normal(kt, (b, l, dim), jnp.float32)
    pos = jax.random.randint(kpos, (b, l, l), -5, 6)
    mask = jnp.broadcast_to(jnp.tril(jnp.ones((l, l), jnp.int32)), (b, l, l))

    out = jax.block_until_ready(mod(x, time_emb, pos, mask))
    assert out.shape == (b, l, n, dim)

    ref = reference_forward(mod, x, time_emb, pos, mask)
    # bf16 weights/activations on the MXU (fp32 accumulation) vs a full-fp32 reference
    # -> tolerance loosened accordingly.
    if not jnp.allclose(out, ref, rtol=5e-2, atol=5e-2):
        max_err = jnp.max(jnp.abs(out - ref))
        raise AssertionError(f"Pallas output mismatch, max abs err = {max_err}")

    print("KERNEL_OK")
</pallas_src>

<mosaic_0001>
module attributes {stable_mosaic.version = 11 : i64} {
  func.func @_rel_attn_kernel(%arg0: i32, %arg1: i32, %arg2: memref<1x8x32xbf16, #tpu.memory_space<vmem>>, %arg3: memref<1x3x32x8xbf16, #tpu.memory_space<vmem>>, %arg4: memref<3x32x8xbf16, #tpu.memory_space<vmem>>, %arg5: memref<1x4x32xbf16, #tpu.memory_space<vmem>>, %arg6: memref<1x16x8xbf16, #tpu.memory_space<vmem>>, %arg7: memref<1x1x16xf32, #tpu.memory_space<vmem>>, %arg8: memref<8x4xbf16, #tpu.memory_space<vmem>>, %arg9: memref<8x16xf32, #tpu.memory_space<vmem>>, %arg10: memref<16x8xbf16, #tpu.memory_space<vmem>>, %arg11: memref<1x1x8x8xf32, #tpu.memory_space<vmem>>, %arg12: memref<3x8x8xf32, #tpu.memory_space<vmem>>) attributes {dimension_semantics = [#tpu.dimension_semantics<parallel>, #tpu.dimension_semantics<arbitrary>], iteration_bounds = array<i64: 2, 4>, scalar_prefetch = 0 : i64, scratch_operands = 1 : i64, tpu.core_type = #tpu.core_type<tc>, window_params = [{transform_indices = @transform_0, window_bounds = array<i64: 1, 8, 32>}, {transform_indices = @transform_1, window_bounds = array<i64: 1, 3, 32, 8>}, {pipeline_mode = #tpu.pipeline_mode<synchronous>, transform_indices = @transform_2, window_bounds = array<i64: 3, 32, 8>}, {transform_indices = @transform_3, window_bounds = array<i64: 1, 4, 32>}, {transform_indices = @transform_4, window_bounds = array<i64: 1, 16, 8>}, {transform_indices = @transform_5, window_bounds = array<i64: 1, 1, 16>}, {pipeline_mode = #tpu.pipeline_mode<synchronous>, transform_indices = @transform_6, window_bounds = array<i64: 8, 4>}, {pipeline_mode = #tpu.pipeline_mode<synchronous>, transform_indices = @transform_7, window_bounds = array<i64: 8, 16>}, {pipeline_mode = #tpu.pipeline_mode<synchronous>, transform_indices = @transform_8, window_bounds = array<i64: 16, 8>}, {transform_indices = @transform_9, window_bounds = array<i64: 1, 1, 8, 8>}]} {
    %c0_i32 = arith.constant 0 : i32
    %0 = arith.cmpi eq, %arg1, %c0_i32 : i32
    %1 = arith.extui %0 : i1 to i32
    %c0_i32_0 = arith.constant 0 : i32
    %2 = arith.cmpi ne, %1, %c0_i32_0 : i32
    scf.if %2 {
      %c0_45 = arith.constant 0 : index
      %c0_46 = arith.constant 0 : index
      %c0_47 = arith.constant 0 : index
      %57 = vector.load %arg5[%c0_45, %c0_46, %c0_47] : memref<1x4x32xbf16, #tpu.memory_space<vmem>>, vector<1x4x32xbf16>
      %58 = vector.shape_cast %57 : vector<1x4x32xbf16> to vector<4x32xbf16>
      %c0_48 = arith.constant 0 : index
      %c0_49 = arith.constant 0 : index
      %59 = vector.load %arg8[%c0_48, %c0_49] : memref<8x4xbf16, #tpu.memory_space<vmem>>, vector<8x4xbf16>
      %c0_50 = arith.constant 0 : index
      %c0_51 = arith.constant 0 : index
      %c0_52 = arith.constant 0 : index
      %60 = vector.load %arg4[%c0_50, %c0_51, %c0_52] : memref<3x32x8xbf16, #tpu.memory_space<vmem>>, vector<1x32x8xbf16>
      %61 = vector.shape_cast %60 : vector<1x32x8xbf16> to vector<32x8xbf16>
      %cst_53 = arith.constant dense<0.000000e+00> : vector<4x8xf32>
      %62 = tpu.matmul %58, %61, %cst_53 {dimension_numbers = #tpu.dot_dimension_numbers<[1], [0], [0], [1], [0, 0, 1, 1], [], []>} : vector<4x32xbf16>, vector<32x8xbf16>, vector<4x8xf32> -> vector<4x8xf32>
      %63 = arith.truncf %62 : vector<4x8xf32> to vector<4x8xbf16>
      %cst_54 = arith.constant dense<0.000000e+00> : vector<8x8xf32>
      %64 = tpu.matmul %59, %63, %cst_54 {dimension_numbers = #tpu.dot_dimension_numbers<[1], [0], [0], [1], [0, 0, 1, 1], [], []>} : vector<8x4xbf16>, vector<4x8xbf16>, vector<8x8xf32> -> vector<8x8xf32>
      %c0_55 = arith.constant 0 : index
      %c0_56 = arith.constant 0 : index
      %c0_57 = arith.constant 0 : index
      %65 = vector.load %arg12[%c0_55, %c0_56, %c0_57] : memref<3x8x8xf32, #tpu.memory_space<vmem>>, vector<1x8x8xf32>
      %66 = vector.shape_cast %65 : vector<1x8x8xf32> to vector<8x8xf32>
      %67 = vector.shape_cast %64 : vector<8x8xf32> to vector<1x8x8xf32>
      tpu.vector_store %arg12[%c0_55, %c0_56, %c0_57], %67 {strides = array<i32>} : memref<3x8x8xf32, #tpu.memory_space<vmem>>, vector<1x8x8xf32>,
      %c1_58 = arith.constant 1 : index
      %c0_59 = arith.constant 0 : index
      %c0_60 = arith.constant 0 : index
      %68 = vector.load %arg4[%c1_58, %c0_59, %c0_60] : memref<3x32x8xbf16, #tpu.memory_space<vmem>>, vector<1x32x8xbf16>
      %69 = vector.shape_cast %68 : vector<1x32x8xbf16> to vector<32x8xbf16>
      %cst_61 = arith.constant dense<0.000000e+00> : vector<4x8xf32>
      %70 = tpu.matmul %58, %69, %cst_61 {dimension_numbers = #tpu.dot_dimension_numbers<[1], [0], [0], [1], [0, 0, 1, 1], [], []>} : vector<4x32xbf16>, vector<32x8xbf16>, vector<4x8xf32> -> vector<4x8xf32>
      %71 = arith.truncf %70 : vector<4x8xf32> to vector<4x8xbf16>
      %cst_62 = arith.constant dense<0.000000e+00> : vector<8x8xf32>
      %72 = tpu.matmul %59, %71, %cst_62 {dimension_numbers = #tpu.dot_dimension_numbers<[1], [0], [0], [1], [0, 0, 1, 1], [], []>} : vector<8x4xbf16>, vector<4x8xbf16>, vector<8x8xf32> -> vector<8x8xf32>
      %c1_63 = arith.constant 1 : index
      %c0_64 = arith.constant 0 : index
      %c0_65 = arith.constant 0 : index
      %73 = vector.load %arg12[%c1_63, %c0_64, %c0_65] : memref<3x8x8xf32, #tpu.memory_space<vmem>>, vector<1x8x8xf32>
      %74 = vector.shape_cast %73 : vector<1x8x8xf32> to vector<8x8xf32>
      %75 = vector.shape_cast %72 : vector<8x8xf32> to vector<1x8x8xf32>
      tpu.vector_store %arg12[%c1_63, %c0_64, %c0_65], %75 {strides = array<i32>} : memref<3x8x8xf32, #tpu.memory_space<vmem>>, vector<1x8x8xf32>,
      %c2_66 = arith.constant 2 : index
      %c0_67 = arith.constant 0 : index
      %c0_68 = arith.constant 0 : index
      %76 = vector.load %arg4[%c2_66, %c0_67, %c0_68] : memref<3x32x8xbf16, #tpu.memory_space<vmem>>, vector<1x32x8xbf16>
      %77 = vector.shape_cast %76 : vector<1x32x8xbf16> to vector<32x8xbf16>
      %cst_69 = arith.constant dense<0.000000e+00> : vector<4x8xf32>
      %78 = tpu.matmul %58, %77, %cst_69 {dimension_numbers = #tpu.dot_dimension_numbers<[1], [0], [0], [1], [0, 0, 1, 1], [], []>} : vector<4x32xbf16>, vector<32x8xbf16>, vector<4x8xf32> -> vector<4x8xf32>
      %79 = arith.truncf %78 : vector<4x8xf32> to vector<4x8xbf16>
      %cst_70 = arith.constant dense<0.000000e+00> : vector<8x8xf32>
      %80 = tpu.matmul %59, %79, %cst_70 {dimension_numbers = #tpu.dot_dimension_numbers<[1], [0], [0], [1], [0, 0, 1, 1], [], []>} : vector<8x4xbf16>, vector<4x8xbf16>, vector<8x8xf32> -> vector<8x8xf32>
      %c2_71 = arith.constant 2 : index
      %c0_72 = arith.constant 0 : index
      %c0_73 = arith.constant 0 : index
      %81 = vector.load %arg12[%c2_71, %c0_72, %c0_73] : memref<3x8x8xf32, #tpu.memory_space<vmem>>, vector<1x8x8xf32>
      %82 = vector.shape_cast %81 : vector<1x8x8xf32> to vector<8x8xf32>
      %83 = vector.shape_cast %80 : vector<8x8xf32> to vector<1x8x8xf32>
      tpu.vector_store %arg12[%c2_71, %c0_72, %c0_73], %83 {strides = array<i32>} : memref<3x8x8xf32, #tpu.memory_space<vmem>>, vector<1x8x8xf32>,
    } else {
    }
    %c0 = arith.constant 0 : index
    %c0_1 = arith.constant 0 : index
    %c0_2 = arith.constant 0 : index
    %3 = vector.load %arg2[%c0, %c0_1, %c0_2] : memref<1x8x32xbf16, #tpu.memory_space<vmem>>, vector<1x8x32xbf16>
    %4 = vector.shape_cast %3 : vector<1x8x32xbf16> to vector<8x32xbf16>
    %c0_3 = arith.constant 0 : index
    %c0_4 = arith.constant 0 : index
    %c0_5 = arith.constant 0 : index
    %c0_6 = arith.constant 0 : index
    %5 = vector.load %arg3[%c0_3, %c0_4, %c0_5, %c0_6] : memref<1x3x32x8xbf16, #tpu.memory_space<vmem>>, vector<1x1x32x8xbf16>
    %6 = vector.shape_cast %5 : vector<1x1x32x8xbf16> to vector<32x8xbf16>
    %cst = arith.constant dense<0.000000e+00> : vector<8x8xf32>
    %7 = tpu.matmul %4, %6, %cst {dimension_numbers = #tpu.dot_dimension_numbers<[1], [0], [0], [1], [0, 0, 1, 1], [], []>} : vector<8x32xbf16>, vector<32x8xbf16>, vector<8x8xf32> -> vector<8x8xf32>
    %c0_7 = arith.constant 0 : index
    %c0_8 = arith.constant 0 : index
    %c0_9 = arith.constant 0 : index
    %8 = vector.load %arg12[%c0_7, %c0_8, %c0_9] : memref<3x8x8xf32, #tpu.memory_space<vmem>>, vector<1x8x8xf32>
    %9 = vector.shape_cast %8 : vector<1x8x8xf32> to vector<8x8xf32>
    %10 = arith.addf %7, %9 : vector<8x8xf32>
    %cst_10 = arith.constant 0.176776692 : f32
    %11 = vector.broadcast %cst_10 : f32 to vector<8x8xf32>
    %12 = arith.mulf %10, %11 : vector<8x8xf32>
    %13 = arith.truncf %12 : vector<8x8xf32> to vector<8x8xbf16>
    %c0_11 = arith.constant 0 : index
    %c1 = arith.constant 1 : index
    %c0_12 = arith.constant 0 : index
    %c0_13 = arith.constant 0 : index
    %14 = vector.load %arg3[%c0_11, %c1, %c0_12, %c0_13] : memref<1x3x32x8xbf16, #tpu.memory_space<vmem>>, vector<1x1x32x8xbf16>
    %15 = vector.shape_cast %14 : vector<1x1x32x8xbf16> to vector<32x8xbf16>
    %cst_14 = arith.constant dense<0.000000e+00> : vector<8x8xf32>
    %16 = tpu.matmul %4, %15, %cst_14 {dimension_numbers = #tpu.dot_dimension_numbers<[1], [0], [0], [1], [0, 0, 1, 1], [], []>} : vector<8x32xbf16>, vector<32x8xbf16>, vector<8x8xf32> -> vector<8x8xf32>
    %c1_15 = arith.constant 1 : index
    %c0_16 = arith.constant 0 : index
    %c0_17 = arith.constant 0 : index
    %17 = vector.load %arg12[%c1_15, %c0_16, %c0_17] : memref<3x8x8xf32, #tpu.memory_space<vmem>>, vector<1x8x8xf32>
    %18 = vector.shape_cast %17 : vector<1x8x8xf32> to vector<8x8xf32>
    %19 = arith.addf %16, %18 : vector<8x8xf32>
    %20 = arith.truncf %19 : vector<8x8xf32> to vector<8x8xbf16>
    %c0_18 = arith.constant 0 : index
    %c2 = arith.constant 2 : index
    %c0_19 = arith.constant 0 : index
    %c0_20 = arith.constant 0 : index
    %21 = vector.load %arg3[%c0_18, %c2, %c0_19, %c0_20] : memref<1x3x32x8xbf16, #tpu.memory_space<vmem>>, vector<1x1x32x8xbf16>
    %22 = vector.shape_cast %21 : vector<1x1x32x8xbf16> to vector<32x8xbf16>
    %cst_21 = arith.constant dense<0.000000e+00> : vector<8x8xf32>
    %23 = tpu.matmul %4, %22, %cst_21 {dimension_numbers = #tpu.dot_dimension_numbers<[1], [0], [0], [1], [0, 0, 1, 1], [], []>} : vector<8x32xbf16>, vector<32x8xbf16>, vector<8x8xf32> -> vector<8x8xf32>
    %c2_22 = arith.constant 2 : index
    %c0_23 = arith.constant 0 : index
    %c0_24 = arith.constant 0 : index
    %24 = vector.load %arg12[%c2_22, %c0_23, %c0_24] : memref<3x8x8xf32, #tpu.memory_space<vmem>>, vector<1x8x8xf32>
    %25 = vector.shape_cast %24 : vector<1x8x8xf32> to vector<8x8xf32>
    %26 = arith.addf %23, %25 : vector<8x8xf32>
    %27 = arith.truncf %26 : vector<8x8xf32> to vector<8x8xbf16>
    %cst_25 = arith.constant dense<0.000000e+00> : vector<8x8xf32>
    %28 = tpu.matmul %13, %20, %cst_25 {dimension_numbers = #tpu.dot_dimension_numbers<[1], [1], [0], [0], [0, 0, 1, 0], [], []>} : vector<8x8xbf16>, vector<8x8xbf16>, vector<8x8xf32> -> vector<8x8xf32>
    %c0_26 = arith.constant 0 : index
    %c0_27 = arith.constant 0 : index
    %c0_28 = arith.constant 0 : index
    %29 = vector.load %arg6[%c0_26, %c0_27, %c0_28] : memref<1x16x8xbf16, #tpu.memory_space<vmem>>, vector<1x16x8xbf16>
    %30 = vector.shape_cast %29 : vector<1x16x8xbf16> to vector<16x8xbf16>
    %cst_29 = arith.constant dense<0.000000e+00> : vector<8x16xf32>
    %31 = tpu.matmul %13, %30, %cst_29 {dimension_numbers = #tpu.dot_dimension_numbers<[1], [1], [0], [0], [0, 0, 1, 0], [], []>} : vector<8x8xbf16>, vector<16x8xbf16>, vector<8x16xf32> -> vector<8x16xf32>
    %c0_30 = arith.constant 0 : index
    %c0_31 = arith.constant 0 : index
    %c0_32 = arith.constant 0 : index
    %32 = vector.load %arg7[%c0_30, %c0_31, %c0_32] : memref<1x1x16xf32, #tpu.memory_space<vmem>>, vector<1x1x16xf32>
    %33 = vector.shape_cast %32 : vector<1x1x16xf32> to vector<1x16xf32>
    %34 = vector.broadcast %33 : vector<1x16xf32> to vector<8x16xf32>
    %35 = arith.addf %31, %34 : vector<8x16xf32>
    %c0_33 = arith.constant 0 : index
    %c0_34 = arith.constant 0 : index
    %36 = vector.load %arg9[%c0_33, %c0_34] : memref<8x16xf32, #tpu.memory_space<vmem>>, vector<8x16xf32>
    %37 = arith.mulf %35, %36 : vector<8x16xf32>
    %38 = arith.truncf %37 : vector<8x16xf32> to vector<8x16xbf16>
    %c0_35 = arith.constant 0 : index
    %c0_36 = arith.constant 0 : index
    %39 = vector.load %arg10[%c0_35, %c0_36] : memref<16x8xbf16, #tpu.memory_space<vmem>>, vector<16x8xbf16>
    %cst_37 = arith.constant dense<0.000000e+00> : vector<8x8xf32>
    %40 = tpu.matmul %38, %39, %cst_37 {dimension_numbers = #tpu.dot_dimension_numbers<[1], [0], [0], [1], [0, 0, 1, 1], [], []>} : vector<8x16xbf16>, vector<16x8xbf16>, vector<8x8xf32> -> vector<8x8xf32>
    %41 = arith.addf %28, %40 : vector<8x8xf32>
    %cst_38 = arith.constant dense<0xFF800000> : vector<8xf32>
    %42 = vector.multi_reduction <maximumf>, %41, %cst_38 [1] : vector<8x8xf32> to vector<8xf32>
    %43 = vector.shape_cast %42 : vector<8xf32> to vector<8x1xf32>
    %44 = vector.broadcast %43 : vector<8x1xf32> to vector<8x8xf32>
    %45 = arith.subf %41, %44 : vector<8x8xf32>
    %46 = math.exp %45 : vector<8x8xf32>
    %cst_39 = arith.constant dense<0.000000e+00> : vector<8xf32>
    %47 = vector.multi_reduction <add>, %46, %cst_39 [1] : vector<8x8xf32> to vector<8xf32>
    %48 = vector.shape_cast %47 : vector<8xf32> to vector<8x1xf32>
    %49 = tpu.reciprocal %48 {approx = true} : vector<8x1xf32> -> vector<8x1xf32>
    %50 = vector.broadcast %49 : vector<8x1xf32> to vector<8x8xf32>
    %51 = arith.mulf %46, %50 : vector<8x8xf32>
    %52 = arith.truncf %51 : vector<8x8xf32> to vector<8x8xbf16>
    %cst_40 = arith.constant dense<0.000000e+00> : vector<8x8xf32>
    %53 = tpu.matmul %52, %27, %cst_40 {dimension_numbers = #tpu.dot_dimension_numbers<[1], [0], [0], [1], [0, 0, 1, 1], [], []>} : vector<8x8xbf16>, vector<8x8xbf16>, vector<8x8xf32> -> vector<8x8xf32>
    %c0_41 = arith.constant 0 : index
    %c0_42 = arith.constant 0 : index
    %c0_43 = arith.constant 0 : index
    %c0_44 = arith.constant 0 : index
    %54 = vector.load %arg11[%c0_41, %c0_42, %c0_43, %c0_44] : memref<1x1x8x8xf32, #tpu.memory_space<vmem>>, vector<1x1x8x8xf32>
    %55 = vector.shape_cast %54 : vector<1x1x8x8xf32> to vector<8x8xf32>
    %56 = vector.shape_cast %53 : vector<8x8xf32> to vector<1x1x8x8xf32>
    tpu.vector_store %arg11[%c0_41, %c0_42, %c0_43, %c0_44], %56 {strides = array<i32>} : memref<1x1x8x8xf32, #tpu.memory_space<vmem>>, vector<1x1x8x8xf32>,
    return
  }
  func.func @transform_0(%arg0: i32, %arg1: i32) -> (i32, i32, i32) {
    %c0_i32 = arith.constant 0 : i32
    %c0_i32_0 = arith.constant 0 : i32
    %c0_i32_1 = arith.constant 0 : i32
    return %arg0, %c0_i32, %c0_i32_0 : i32, i32, i32
  }
  func.func @transform_1(%arg0: i32, %arg1: i32) -> (i32, i32, i32, i32) {
    %c0_i32 = arith.constant 0 : i32
    %c0_i32_0 = arith.constant 0 : i32
    %c0_i32_1 = arith.constant 0 : i32
    %c0_i32_2 = arith.constant 0 : i32
    return %arg1, %c0_i32, %c0_i32_0, %c0_i32_1 : i32, i32, i32, i32
  }
  func.func @transform_2(%arg0: i32, %arg1: i32) -> (i32, i32, i32) {
    %c0_i32 = arith.constant 0 : i32
    %c0_i32_0 = arith.constant 0 : i32
    %c0_i32_1 = arith.constant 0 : i32
    %c0_i32_2 = arith.constant 0 : i32
    return %c0_i32, %c0_i32_0, %c0_i32_1 : i32, i32, i32
  }
  func.func @transform_3(%arg0: i32, %arg1: i32) -> (i32, i32, i32) {
    %c0_i32 = arith.constant 0 : i32
    %c0_i32_0 = arith.constant 0 : i32
    %c0_i32_1 = arith.constant 0 : i32
    return %arg0, %c0_i32, %c0_i32_0 : i32, i32, i32
  }
  func.func @transform_4(%arg0: i32, %arg1: i32) -> (i32, i32, i32) {
    %c0_i32 = arith.constant 0 : i32
    %c0_i32_0 = arith.constant 0 : i32
    %c0_i32_1 = arith.constant 0 : i32
    return %arg0, %c0_i32, %c0_i32_0 : i32, i32, i32
  }
  func.func @transform_5(%arg0: i32, %arg1: i32) -> (i32, i32, i32) {
    %c0_i32 = arith.constant 0 : i32
    %c0_i32_0 = arith.constant 0 : i32
    %c0_i32_1 = arith.constant 0 : i32
    return %arg0, %c0_i32, %c0_i32_0 : i32, i32, i32
  }
  func.func @transform_6(%arg0: i32, %arg1: i32) -> (i32, i32) {
    %c0_i32 = arith.constant 0 : i32
    %c0_i32_0 = arith.constant 0 : i32
    %c0_i32_1 = arith.constant 0 : i32
    return %c0_i32, %c0_i32_0 : i32, i32
  }
  func.func @transform_7(%arg0: i32, %arg1: i32) -> (i32, i32) {
    %c0_i32 = arith.constant 0 : i32
    %c0_i32_0 = arith.constant 0 : i32
    %c0_i32_1 = arith.constant 0 : i32
    return %c0_i32, %c0_i32_0 : i32, i32
  }
  func.func @transform_8(%arg0: i32, %arg1: i32) -> (i32, i32) {
    %c0_i32 = arith.constant 0 : i32
    %c0_i32_0 = arith.constant 0 : i32
    %c0_i32_1 = arith.constant 0 : i32
    return %c0_i32, %c0_i32_0 : i32, i32
  }
  func.func @transform_9(%arg0: i32, %arg1: i32) -> (i32, i32, i32, i32) {
    %c0_i32 = arith.constant 0 : i32
    %c0_i32_0 = arith.constant 0 : i32
    %c0_i32_1 = arith.constant 0 : i32
    return %arg0, %arg1, %c0_i32, %c0_i32_0 : i32, i32, i32, i32
  }
}

</mosaic_0001>

<llo_original>
// kernel: tpu_custom_call.1
$region0: #{tpu_custom_call.1}
  #allocation0 [shape = 'u32[]', space=smem, size = 0x4, offset = 0x4, fixed_abs, tag = 'smem constant byte address 0x4 - core index']
  #allocation1 [shape = 'u32[144,128]{1,0:T(1,128)}', space=vmem, size = 0x12000, scoped, tag = 'internal scratch']
  #allocation2 [shape = 'f32[3,8,8]{2,1,0:T(8,128)}', space=vmem, size = 0x3000, scoped, tag = 'scratch operand']
  %s0 = inlined_call_operand.vmem [shape: bf16[2,8,32], index: 0, kind: input, shape index: {}]
  %s1 = inlined_call_operand.vmem [shape: bf16[4,3,32,8], index: 1, kind: input, shape index: {}]
  %s2 = inlined_call_operand.vmem [shape: bf16[3,32,8], index: 2, kind: input, shape index: {}]
  %s3 = inlined_call_operand.vmem [shape: bf16[2,4,32], index: 3, kind: input, shape index: {}]
  %s4 = inlined_call_operand.vmem [shape: bf16[2,16,8], index: 4, kind: input, shape index: {}]
  %s5 = inlined_call_operand.vmem [shape: f32[2,1,16], index: 5, kind: input, shape index: {}]
  %s6 = inlined_call_operand.vmem [shape: bf16[8,4], index: 6, kind: input, shape index: {}]
  %s7 = inlined_call_operand.vmem [shape: f32[8,16], index: 7, kind: input, shape index: {}]
  %s8 = inlined_call_operand.vmem [shape: bf16[16,8], index: 8, kind: input, shape index: {}]
  %s9 = inlined_call_operand.hbm [shape: f32[2,4,8,8], index: 9, kind: output, shape index: {}]
  %s10 = sld [smem:[#allocation0]]
  $region73: #{tpu_custom_call.1} parent=0
    _
  %s12 = ssub.s32 1, %s10
  %s13 = scalar_select 0, %s12, %s10
  $region1: #{tpu_custom_call.1} parent=0
    #allocation3 [shape = 'u8[8192]{0}', space=vmem, size = 0x2000, scoped, tag = 'output window, operand 0']
    #allocation4 [shape = 's32[2]{0}', space=sflag, size = 0x8, scoped, tag = 'scoped memory for tpu_custom_call.1']
    %14 = vsyncpa [#allocation4], 0
    %s15 = scalar_lea.sflag [#allocation4], 1
    %16 = vsyncpa %s15, 0
    loop: start=0, step=1, limit=10
    $region2: #{tpu_custom_call.1} parent=1 // loop_pre_header
      _
    $region3: #{tpu_custom_call.1} parent=1 // loop_header
      %s18 = sphi 0, %s22
      %p19 = scmp.ge.s32.totalorder %s18, 10
      %s25 = sphi 0, %s37
      %s26 = sphi 0, %s33
      %s27 = sphi 0, %s25
      %s28 = sphi 0, %s26
      %s29 = sphi 0, %s27
      %s30 = sphi 0, %s28
      %s40 = sphi 0, %s42
      %s43 = sphi 0, %s40
      %s44 = sphi 0, %s43
      %s60 = sphi 0, %s44
      %s66 = sphi 0, %s68
      %s69 = sphi 0, %s66
      %s70 = sphi 0, %s69
      %s86 = sphi 0, %s70
      %s90 = sphi 0, %s90
      %s92 = sphi 0, %s90
      %s93 = sphi 0, %s92
      %s107 = sphi 0, %s93
      %s113 = sphi 0, %s115
      %s116 = sphi 0, %s113
      %s117 = sphi 0, %s116
      %s133 = sphi 0, %s117
      %s139 = sphi 0, %s141
      %s142 = sphi 0, %s139
      %s143 = sphi 0, %s142
      %s159 = sphi 0, %s143
      %s165 = sphi 0, %s167
      %s168 = sphi 0, %s165
      %s169 = sphi 0, %s168
      %s185 = sphi 0, %s169
      %s189 = sphi 0, %s189
      %s191 = sphi 0, %s189
      %s192 = sphi 0, %s191
      %s206 = sphi 0, %s192
      %s210 = sphi 0, %s210
      %s212 = sphi 0, %s210
      %s213 = sphi 0, %s212
      %s227 = sphi 0, %s213
      %s231 = sphi 0, %s231
      %s233 = sphi 0, %s231
      %s234 = sphi 0, %s233
      %s248 = sphi 0, %s234
      %s256 = sphi 0, %s258
      %s259 = sphi 0, %s256
      %s260 = sphi 0, %s259
      %s276 = sphi 0, %s260
    $region4: #{tpu_custom_call.1} parent=1 // loop_header_branch
      %21 = sbr.rel (%p19) target = $region8
    $region5: #{tpu_custom_call.1} parent=1 // loop_body
      %s23 = ssub.s32 %s18, 1
      %s24 = ssub.s32 %s18, 2
      %s31 = sadd.s32 1, %s26
      %p32 = scmp.ge.s32.totalorder %s31, 4
      %s33 = scalar_select %p32, 0, %s31
      %s34 = sadd.s32 1, %s25
      %s35 = scalar_select %p32, %s34, %s25
      %p36 = scmp.ge.s32.totalorder %s35, 2
      %s37 = scalar_select %p36, 0, %s35
      %s38 = ssub.s32 %s25, %s37
      %p39 = scmp.eq.s32.totalorder %s38, 0
      %s41 = sadd.s32 %s40, 1
      %s42 = scalar_select %p39, %s40, %s41
      %p45 = pneg %p39
      %p46 = scmp.eq.s32.totalorder %s18, 7
      %p47 = por %p45, %p46
      %p48 = scmp.ne.s32.totalorder %s40, %s43
      %p49 = scmp.eq.s32.totalorder %s18, 0
      %p50 = por %p48, %p49
      %p51 = scmp.ne.s32.totalorder %s40, %s43
      %p52 = scmp.eq.s32.totalorder %s23, 7
      %p53 = por %p51, %p52
      %p54 = scmp.ne.s32.totalorder %s43, %s44
      %p55 = scmp.eq.s32.totalorder %s23, 0
      %p56 = por %p54, %p55
      %p57 = scmp.ne.s32.totalorder %s43, %s44
      %p58 = scmp.eq.s32.totalorder %s24, 7
      %p59 = por %p57, %p58
      %p61 = scmp.ne.s32.totalorder %s44, %s60
      %p62 = scmp.eq.s32.totalorder %s24, 0
      %p63 = por %p61, %p62
      %s64 = ssub.s32 %s26, %s33
      %p65 = scmp.eq.s32.totalorder %s64, 0
      %s67 = sadd.s32 %s66, 1
      %s68 = scalar_select %p65, %s66, %s67
      %p71 = pneg %p65
      %p72 = scmp.eq.s32.totalorder %s18, 7
      %p73 = por %p71, %p72
      %p74 = scmp.ne.s32.totalorder %s66, %s69
      %p75 = scmp.eq.s32.totalorder %s18, 0
      %p76 = por %p74, %p75
      %p77 = scmp.ne.s32.totalorder %s66, %s69
      %p78 = scmp.eq.s32.totalorder %s23, 7
      %p79 = por %p77, %p78
      %p80 = scmp.ne.s32.totalorder %s69, %s70
      %p81 = scmp.eq.s32.totalorder %s23, 0
      %p82 = por %p80, %p81
      %p83 = scmp.ne.s32.totalorder %s69, %s70
      %p84 = scmp.eq.s32.totalorder %s24, 7
      %p85 = por %p83, %p84
      %p87 = scmp.ne.s32.totalorder %s70, %s86
      %p88 = scmp.eq.s32.totalorder %s24, 0
      %p89 = por %p87, %p88
      %s91 = sadd.s32 %s90, 1
      %p94 = scmp.eq.s32.totalorder %s18, 7
      %p95 = scmp.ne.s32.totalorder %s90, %s92
      %p96 = scmp.eq.s32.totalorder %s18, 0
      %p97 = por %p95, %p96
      %p98 = scmp.ne.s32.totalorder %s90, %s92
      %p99 = scmp.eq.s32.totalorder %s23, 7
      %p100 = por %p98, %p99
      %p101 = scmp.ne.s32.totalorder %s92, %s93
      %p102 = scmp.eq.s32.totalorder %s23, 0
      %p103 = por %p101, %p102
      %p104 = scmp.ne.s32.totalorder %s92, %s93
      %p105 = scmp.eq.s32.totalorder %s24, 7
      %p106 = por %p104, %p105
      %p108 = scmp.ne.s32.totalorder %s93, %s107
      %p109 = scmp.eq.s32.totalorder %s24, 0
      %p110 = por %p108, %p109
      %s111 = ssub.s32 %s25, %s37
      %p112 = scmp.eq.s32.totalorder %s111, 0
      %s114 = sadd.s32 %s113, 1
      %s115 = scalar_select %p112, %s113, %s114
      %p118 = pneg %p112
      %p119 = scmp.eq.s32.totalorder %s18, 7
      %p120 = por %p118, %p119
      %p121 = scmp.ne.s32.totalorder %s113, %s116
      %p122 = scmp.eq.s32.totalorder %s18, 0
      %p123 = por %p121, %p122
      %p124 = scmp.ne.s32.totalorder %s113, %s116
      %p125 = scmp.eq.s32.totalorder %s23, 7
      %p126 = por %p124, %p125
      %p127 = scmp.ne.s32.totalorder %s116, %s117
      %p128 = scmp.eq.s32.totalorder %s23, 0
      %p129 = por %p127, %p128
      %p130 = scmp.ne.s32.totalorder %s116, %s117
      %p131 = scmp.eq.s32.totalorder %s24, 7
      %p132 = por %p130, %p131
      %p134 = scmp.ne.s32.totalorder %s117, %s133
      %p135 = scmp.eq.s32.totalorder %s24, 0
      %p136 = por %p134, %p135
      %s137 = ssub.s32 %s25, %s37
      %p138 = scmp.eq.s32.totalorder %s137, 0
      %s140 = sadd.s32 %s139, 1
      %s141 = scalar_select %p138, %s139, %s140
      %p144 = pneg %p138
      %p145 = scmp.eq.s32.totalorder %s18, 7
      %p146 = por %p144, %p145
      %p147 = scmp.ne.s32.totalorder %s139, %s142
      %p148 = scmp.eq.s32.totalorder %s18, 0
      %p149 = por %p147, %p148
      %p150 = scmp.ne.s32.totalorder %s139, %s142
      %p151 = scmp.eq.s32.totalorder %s23, 7
      %p152 = por %p150, %p151
      %p153 = scmp.ne.s32.totalorder %s142, %s143
      %p154 = scmp.eq.s32.totalorder %s23, 0
      %p155 = por %p153, %p154
      %p156 = scmp.ne.s32.totalorder %s142, %s143
      %p157 = scmp.eq.s32.totalorder %s24, 7
      %p158 = por %p156, %p157
      %p160 = scmp.ne.s32.totalorder %s143, %s159
      %p161 = scmp.eq.s32.totalorder %s24, 0
      %p162 = por %p160, %p161
      %s163 = ssub.s32 %s25, %s37
      %p164 = scmp.eq.s32.totalorder %s163, 0
      %s166 = sadd.s32 %s165, 1
      %s167 = scalar_select %p164, %s165, %s166
      %p170 = pneg %p164
      %p171 = scmp.eq.s32.totalorder %s18, 7
      %p172 = por %p170, %p171
      %p173 = scmp.ne.s32.totalorder %s165, %s168
      %p174 = scmp.eq.s32.totalorder %s18, 0
      %p175 = por %p173, %p174
      %p176 = scmp.ne.s32.totalorder %s165, %s168
      %p177 = scmp.eq.s32.totalorder %s23, 7
      %p178 = por %p176, %p177
      %p179 = scmp.ne.s32.totalorder %s168, %s169
      %p180 = scmp.eq.s32.totalorder %s23, 0
      %p181 = por %p179, %p180
      %p182 = scmp.ne.s32.totalorder %s168, %s169
      %p183 = scmp.eq.s32.totalorder %s24, 7
      %p184 = por %p182, %p183
      %p186 = scmp.ne.s32.totalorder %s169, %s185
      %p187 = scmp.eq.s32.totalorder %s24, 0
      %p188 = por %p186, %p187
      %s190 = sadd.s32 %s189, 1
      %p193 = scmp.eq.s32.totalorder %s18, 7
      %p194 = scmp.ne.s32.totalorder %s189, %s191
      %p195 = scmp.eq.s32.totalorder %s18, 0
      %p196 = por %p194, %p195
      %p197 = scmp.ne.s32.totalorder %s189, %s191
      %p198 = scmp.eq.s32.totalorder %s23, 7
      %p199 = por %p197, %p198
      %p200 = scmp.ne.s32.totalorder %s191, %s192
      %p201 = scmp.eq.s32.totalorder %s23, 0
      %p202 = por %p200, %p201
      %p203 = scmp.ne.s32.totalorder %s191, %s192
      %p204 = scmp.eq.s32.totalorder %s24, 7
      %p205 = por %p203, %p204
      %p207 = scmp.ne.s32.totalorder %s192, %s206
      %p208 = scmp.eq.s32.totalorder %s24, 0
      %p209 = por %p207, %p208
      %s211 = sadd.s32 %s210, 1
      %p214 = scmp.eq.s32.totalorder %s18, 7
      %p215 = scmp.ne.s32.totalorder %s210, %s212
      %p216 = scmp.eq.s32.totalorder %s18, 0
      %p217 = por %p215, %p216
      %p218 = scmp.ne.s32.totalorder %s210, %s212
      %p219 = scmp.eq.s32.totalorder %s23, 7
      %p220 = por %p218, %p219
      %p221 = scmp.ne.s32.totalorder %s212, %s213
      %p222 = scmp.eq.s32.totalorder %s23, 0
      %p223 = por %p221, %p222
      %p224 = scmp.ne.s32.totalorder %s212, %s213
      %p225 = scmp.eq.s32.totalorder %s24, 7
      %p226 = por %p224, %p225
      %p228 = scmp.ne.s32.totalorder %s213, %s227
      %p229 = scmp.eq.s32.totalorder %s24, 0
      %p230 = por %p228, %p229
      %s232 = sadd.s32 %s231, 1
      %p235 = scmp.eq.s32.totalorder %s18, 7
      %p236 = scmp.ne.s32.totalorder %s231, %s233
      %p237 = scmp.eq.s32.totalorder %s18, 0
      %p238 = por %p236, %p237
      %p239 = scmp.ne.s32.totalorder %s231, %s233
      %p240 = scmp.eq.s32.totalorder %s23, 7
      %p241 = por %p239, %p240
      %p242 = scmp.ne.s32.totalorder %s233, %s234
      %p243 = scmp.eq.s32.totalorder %s23, 0
      %p244 = por %p242, %p243
      %p245 = scmp.ne.s32.totalorder %s233, %s234
      %p246 = scmp.eq.s32.totalorder %s24, 7
      %p247 = por %p245, %p246
      %p249 = scmp.ne.s32.totalorder %s234, %s248
      %p250 = scmp.eq.s32.totalorder %s24, 0
      %p251 = por %p249, %p250
      %s252 = ssub.s32 %s25, %s37
      %s253 = ssub.s32 %s26, %s33
      %s254 = sor.u32 %s252, %s253
      %p255 = scmp.eq.s32.totalorder %s254, 0
      %s257 = sadd.s32 %s256, 1
      %s258 = scalar_select %p255, %s256, %s257
      %p261 = pneg %p255
      %p262 = scmp.eq.s32.totalorder %s18, 7
      %p263 = por %p261, %p262
      %p264 = scmp.ne.s32.totalorder %s256, %s259
      %p265 = scmp.eq.s32.totalorder %s18, 0
      %p266 = por %p264, %p265
      %p267 = scmp.ne.s32.totalorder %s256, %s259
      %p268 = scmp.eq.s32.totalorder %s23, 7
      %p269 = por %p267, %p268
      %p270 = scmp.ne.s32.totalorder %s259, %s260
      %p271 = scmp.eq.s32.totalorder %s23, 0
      %p272 = por %p270, %p271
      %p273 = scmp.ne.s32.totalorder %s259, %s260
      %p274 = scmp.eq.s32.totalorder %s24, 7
      %p275 = por %p273, %p274
      %p277 = scmp.ne.s32.totalorder %s260, %s276
      %p278 = scmp.eq.s32.totalorder %s24, 0
      %p279 = por %p277, %p278
      %p280 = scmp.le.s32.totalorder 1, %s18
      %p281 = scmp.lt.s32.totalorder %s18, 9
      %p282 = pnand %p280, %p281
      %p283 = pneg %p282
      // Predicated region
      $region9: #{tpu_custom_call.1} parent=5 // pred_check
        _
      $region10: #{tpu_custom_call.1} parent=5 // pred_check_branch
        %285 = sbr.rel (%p282) target = $region12
      $region11: #{tpu_custom_call.1} parent=5 // pred_region
        %s286 = ssub.s32 %s18, 1
        // Predicated region
        $region13: #{tpu_custom_call.1} parent=11 // pred_check
          %p287 = pneg %p103
        $region14: #{tpu_custom_call.1} parent=11 // pred_check_branch
          %289 = sbr.rel (%p287) target = $region16
        $region15: #{tpu_custom_call.1} parent=11 // pred_region
          _
        $region16: #{tpu_custom_call.1} parent=11 // pred_fallthru
          _
        // Predicated region
        $region17: #{tpu_custom_call.1} parent=11 // pred_check
          %p290 = pneg %p202
        $region18: #{tpu_custom_call.1} parent=11 // pred_check_branch
          %292 = sbr.rel (%p290) target = $region20
        $region19: #{tpu_custom_call.1} parent=11 // pred_region
          _
        $region20: #{tpu_custom_call.1} parent=11 // pred_fallthru
          _
        // Predicated region
        $region21: #{tpu_custom_call.1} parent=11 // pred_check
          %p293 = pneg %p223
        $region22: #{tpu_custom_call.1} parent=11 // pred_check_branch
          %295 = sbr.rel (%p293) target = $region24
        $region23: #{tpu_custom_call.1} parent=11 // pred_region
          _
        $region24: #{tpu_custom_call.1} parent=11 // pred_fallthru
          _
        // Predicated region
        $region25: #{tpu_custom_call.1} parent=11 // pred_check
          %p296 = pneg %p244
        $region26: #{tpu_custom_call.1} parent=11 // pred_check_branch
          %298 = sbr.rel (%p296) target = $region28
        $region27: #{tpu_custom_call.1} parent=11 // pred_region
          _
        $region28: #{tpu_custom_call.1} parent=11 // pred_fallthru
          _
      $region12: #{tpu_custom_call.1} parent=5 // pred_fallthru
        _
      %p299 = scmp.lt.s32.totalorder %s18, 8
      // Predicated region
      $region29: #{tpu_custom_call.1} parent=5 // pred_check
        %p300 = pneg %p299
      $region30: #{tpu_custom_call.1} parent=5 // pred_check_branch
        %302 = sbr.rel (%p300) target = $region32
      $region31: #{tpu_custom_call.1} parent=5 // pred_region
        // Predicated region
        $region33: #{tpu_custom_call.1} parent=31 // pred_check
          %p303 = pneg %p50
        $region34: #{tpu_custom_call.1} parent=31 // pred_check_branch
          %305 = sbr.rel (%p303) target = $region36
        $region35: #{tpu_custom_call.1} parent=31 // pred_region
          %p306 = scmp.lt.s32.totalorder %s25, 1
          %s307 = scalar_select %p306, %s25, 1
          %s308 = smul.addr %s307, 4
          %s309 = scalar_lea.vmem %s0, %s308
        $region36: #{tpu_custom_call.1} parent=31 // pred_fallthru
          _
        // Predicated region
        $region37: #{tpu_custom_call.1} parent=31 // pred_check
          %p310 = pneg %p76
        $region38: #{tpu_custom_call.1} parent=31 // pred_check_branch
          %312 = sbr.rel (%p310) target = $region40
        $region39: #{tpu_custom_call.1} parent=31 // pred_region
          %p313 = scmp.lt.s32.totalorder %s26, 3
          %s314 = scalar_select %p313, %s26, 3
          %s315 = smul.addr %s314, 12
          %s316 = smul.addr %s315, 4
          %s317 = scalar_lea.vmem %s1, %s316
        $region40: #{tpu_custom_call.1} parent=31 // pred_fallthru
          _
        // Predicated region
        $region41: #{tpu_custom_call.1} parent=31 // pred_check
          %p318 = pneg %p123
        $region42: #{tpu_custom_call.1} parent=31 // pred_check_branch
          %320 = sbr.rel (%p318) target = $region44
        $region43: #{tpu_custom_call.1} parent=31 // pred_region
          %p321 = scmp.lt.s32.totalorder %s25, 1
          %s322 = scalar_select %p321, %s25, 1
          %s323 = smul.addr %s322, 2
          %s324 = scalar_lea.vmem %s3, %s323
        $region44: #{tpu_custom_call.1} parent=31 // pred_fallthru
          _
        // Predicated region
        $region45: #{tpu_custom_call.1} parent=31 // pred_check
          %p325 = pneg %p149
        $region46: #{tpu_custom_call.1} parent=31 // pred_check_branch
          %327 = sbr.rel (%p325) target = $region48
        $region47: #{tpu_custom_call.1} parent=31 // pred_region
          %p328 = scmp.lt.s32.totalorder %s25, 1
          %s329 = scalar_select %p328, %s25, 1
          %s330 = smul.addr %s329, 2
          %s331 = smul.addr %s330, 4
          %s332 = scalar_lea.vmem %s4, %s331
        $region48: #{tpu_custom_call.1} parent=31 // pred_fallthru
          _
        // Predicated region
        $region49: #{tpu_custom_call.1} parent=31 // pred_check
          %p333 = pneg %p175
        $region50: #{tpu_custom_call.1} parent=31 // pred_check_branch
          %335 = sbr.rel (%p333) target = $region52
        $region51: #{tpu_custom_call.1} parent=31 // pred_region
          %p336 = scmp.lt.s32.totalorder %s25, 1
          %s337 = scalar_select %p336, %s25, 1
          %s338 = scalar_lea.vmem %s5, %s337
        $region52: #{tpu_custom_call.1} parent=31 // pred_fallthru
          _
      $region32: #{tpu_custom_call.1} parent=5 // pred_fallthru
        _
      %p339 = scmp.le.s32.totalorder 1, %s18
      %p340 = scmp.lt.s32.totalorder %s18, 9
      %p341 = pnand %p339, %p340
      %p342 = pneg %p341
      // Predicated region
      $region53: #{tpu_custom_call.1} parent=5 // pred_check
        _
      $region54: #{tpu_custom_call.1} parent=5 // pred_check_branch
        %344 = sbr.rel (%p341) target = $region56
      $region55: #{tpu_custom_call.1} parent=5 // pred_region
        %s345 = ssub.s32 %s18, 1
        %p346 = scmp.lt.s32.totalorder %s27, 1
        %s347 = scalar_select %p346, %s27, 1
        %s348 = smul.addr %s347, 4
        %s349 = scalar_lea.vmem %s0, %s348
        %p350 = pneg %p56
        %p351 = pneg %p53
        %p352 = scmp.lt.s32.totalorder %s28, 3
        %s353 = scalar_select %p352, %s28, 3
        %s354 = smul.addr %s353, 12
        %s355 = smul.addr %s354, 4
        %s356 = scalar_lea.vmem %s1, %s355
        %p357 = pneg %p82
        %p358 = pneg %p79
        %p359 = pneg %p103
        %p360 = pneg %p100
        %p361 = scmp.lt.s32.totalorder %s27, 1
        %s362 = scalar_select %p361, %s27, 1
        %s363 = smul.addr %s362, 2
        %s364 = scalar_lea.vmem %s3, %s363
        %p365 = pneg %p129
        %p366 = pneg %p126
        %p367 = scmp.lt.s32.totalorder %s27, 1
        %s368 = scalar_select %p367, %s27, 1
        %s369 = smul.addr %s368, 2
        %s370 = smul.addr %s369, 4
        %s371 = scalar_lea.vmem %s4, %s370
        %p372 = pneg %p155
        %p373 = pneg %p152
        %p374 = scmp.lt.s32.totalorder %s27, 1
        %s375 = scalar_select %p374, %s27, 1
        %s376 = scalar_lea.vmem %s5, %s375
        %p377 = pneg %p181
        %p378 = pneg %p178
        %p379 = pneg %p202
        %p380 = pneg %p199
        %p381 = pneg %p223
        %p382 = pneg %p220
        %p383 = pneg %p244
        %p384 = pneg %p241
        %p385 = pneg %p272
        %p386 = pneg %p269
        %s387 = sand.u32 %s259, 1
        %s388 = scalar_lea.sflag [#allocation4], %s387
        %s389 = sand.u32 %s259, 1
        %s390 = smul.addr %s389, 8
        %s391 = scalar_lea.vmem [#allocation3], %s390
        %p392 = scmp.lt.s32.totalorder %s27, 1
        %s393 = scalar_select %p392, %s27, 1
        %s394 = smul.addr %s393, 4
        %s395 = scalar_lea.vmem %s0, %s394
        %p396 = scmp.lt.s32.totalorder %s28, 3
        %s397 = scalar_select %p396, %s28, 3
        %s398 = smul.addr %s397, 12
        %s399 = smul.addr %s398, 4
        %s400 = scalar_lea.vmem %s1, %s399
        %p401 = scmp.lt.s32.totalorder %s27, 1
        %s402 = scalar_select %p401, %s27, 1
        %s403 = smul.addr %s402, 2
        %s404 = scalar_lea.vmem %s3, %s403
        %p405 = scmp.lt.s32.totalorder %s27, 1
        %s406 = scalar_select %p405, %s27, 1
        %s407 = smul.addr %s406, 2
        %s408 = smul.addr %s407, 4
        %s409 = scalar_lea.vmem %s4, %s408
        %p410 = scmp.lt.s32.totalorder %s27, 1
        %s411 = scalar_select %p410, %s27, 1
        %s412 = scalar_lea.vmem %s5, %s411
        %p414 = scmp.eq.s32.totalorder %s28, 0
        // Predicated region
        $region57: #{tpu_custom_call.1} parent=55 // pred_check
          %p415 = pneg %p414
        $region58: #{tpu_custom_call.1} parent=55 // pred_check_branch
          %417 = sbr.rel (%p415) target = $region60
        $region59: #{tpu_custom_call.1} parent=55 // pred_region
          %v418 = vld [vmem:[%s404] sm:$0x3]
          %v419 = vld [vmem:[%s6] sm:$0xf]
          %v420 = vld [vmem:[%s2] sm:$0xf]
          %v421 = vld [vmem:[%s2 + $0x4] sm:$0xf]
          %v422 = vld [vmem:[%s2 + $0x8] sm:$0xf]
          %v423 = vld [vmem:[%s2 + $0xc] sm:$0xf]
          %v428 = vunpack.c.l.b16 %v420
          %v429 = vunpack.c.l.b16 %v421
          %v430 = vunpack.c.l.b16 %v422
          %v431 = vunpack.c.l.b16 %v423
          %v432 = vpack.c.b16 %v429, %v428
          %v433 = vpack.c.b16 %v431, %v430
          %vm436 = vcmask 261120
          %v438 = vsel %vm436, %v418, 0
          %440 = vmatprep.subr.bf16.mxu0 0
          %441 = vmatpush1.bf16.msra.mxu0 %v432
          %442 = vmatprep.subr.bf16.mxu0 0
          %443 = vmatpush1.bf16.msra.mxu0 %v433
          %444 = vmatprep.subr.bf16.mxu0 0
          %445 = vmatpush1.bf16.msra.mxu0 0
          %446 = vmatprep.subr.bf16.mxu0 0
          %447 = vmatpush1.bf16.msra.mxu0 0
          %448 = vmatprep.subr.bf16.mxu0 0
          %449 = vmatpush1.bf16.msra.mxu0 0
          %450 = vmatprep.subr.bf16.mxu0 0
          %451 = vmatpush1.bf16.msra.mxu0 0
          %452 = vmatprep.subr.bf16.mxu0 0
          %453 = vmatpush1.bf16.msra.mxu0 0
          %454 = vmatprep.subr.bf16.mxu0 0
          %455 = vmatpush1.bf16.msra.mxu0 0
          %456 = vmatprep.subr.bf16.mxu0 0
          %457 = vmatpush1.bf16.msra.mxu0 0
          %458 = vmatprep.subr.bf16.mxu0 0
          %459 = vmatpush1.bf16.msra.mxu0 0
          %460 = vmatprep.subr.bf16.mxu0 0
          %461 = vmatpush1.bf16.msra.mxu0 0
          %462 = vmatprep.subr.bf16.mxu0 0
          %463 = vmatpush1.bf16.msra.mxu0 0
          %464 = vmatprep.subr.bf16.mxu0 0
          %465 = vmatpush1.bf16.msra.mxu0 0
          %466 = vmatprep.subr.bf16.mxu0 0
          %467 = vmatpush1.bf16.msra.mxu0 0
          %468 = vmatprep.subr.bf16.mxu0 0
          %469 = vmatpush1.bf16.msra.mxu0 0
          %470 = vmatprep.subr.bf16.mxu0 0
          %471 = vmatpush1.bf16.msra.mxu0 0
          %472 = vmatprep.mubr.bf16.mxu0 0
          %473 = vmatmul.mubr.bf16.gmra.mrb[0].mxu0 %v438
          %v474 = vpop.f32.mrb[0].mxu0
          %v475 = vadd.f32 0.0, %v474
          %v476 = vpop.f32.mrb[0].mxu0
          %v477 = vpop.f32.mrb[0].mxu0
          %v478 = vpop.f32.mrb[0].mxu0
          %479 = vdwg.mxu0
          %v480 = vpack.c.bf16 %v475, %v475
          %vm481 = vcmask 31744
          %v483 = vsel %vm481, %v419, 0
          %vm485 = vcmask 1041408
          %v487 = vsel %vm485, %v480, 0
          %489 = vmatprep.subr.bf16.mxu0 0
          %490 = vmatpush1.bf16.msra.mxu0 %v487
          %491 = vmatprep.subr.bf16.mxu0 0
          %492 = vmatpush1.bf16.msra.mxu0 0
          %493 = vmatprep.subr.bf16.mxu0 0
          %494 = vmatpush1.bf16.msra.mxu0 0
          %495 = vmatprep.subr.bf16.mxu0 0
          %496 = vmatpush1.bf16.msra.mxu0 0
          %497 = vmatprep.subr.bf16.mxu0 0
          %498 = vmatpush1.bf16.msra.mxu0 0
          %499 = vmatprep.subr.bf16.mxu0 0
          %500 = vmatpush1.bf16.msra.mxu0 0
          %501 = vmatprep.subr.bf16.mxu0 0
          %502 = vmatpush1.bf16.msra.mxu0 0
          %503 = vmatprep.subr.bf16.mxu0 0
          %504 = vmatpush1.bf16.msra.mxu0 0
          %505 = vmatprep.subr.bf16.mxu0 0
          %506 = vmatpush1.bf16.msra.mxu0 0
          %507 = vmatprep.subr.bf16.mxu0 0
          %508 = vmatpush1.bf16.msra.mxu0 0
          %509 = vmatprep.subr.bf16.mxu0 0
          %510 = vmatpush1.bf16.msra.mxu0 0
          %511 = vmatprep.subr.bf16.mxu0 0
          %512 = vmatpush1.bf16.msra.mxu0 0
          %513 = vmatprep.subr.bf16.mxu0 0
          %514 = vmatpush1.bf16.msra.mxu0 0
          %515 = vmatprep.subr.bf16.mxu0 0
          %516 = vmatpush1.bf16.msra.mxu0 0
          %517 = vmatprep.subr.bf16.mxu0 0
          %518 = vmatpush1.bf16.msra.mxu0 0
          %519 = vmatprep.subr.bf16.mxu0 0
          %520 = vmatpush1.bf16.msra.mxu0 0
          %521 = vmatprep.mubr.bf16.mxu0 0
          %522 = vmatmul.mubr.bf16.gmra.mrb[0].mxu0 %v483
          %v523 = vpop.f32.mrb[0].mxu0
          %v524 = vadd.f32 0.0, %v523
          %v525 = vpop.f32.mrb[0].mxu0
          %v526 = vpop.f32.mrb[0].mxu0
          %v527 = vpop.f32.mrb[0].mxu0
          %528 = vdwg.mxu0
          %vm529 = vcmask 64512
          %530 = vst.msk [vmem:[#allocation2] sm:$0xff] %vm529, %v524
          %s531 = scalar_lea.vmem %s2, 16
          %v532 = vld [vmem:[%s531] sm:$0xf]
          %v533 = vld [vmem:[%s531 + $0x4] sm:$0xf]
          %v534 = vld [vmem:[%s531 + $0x8] sm:$0xf]
          %v535 = vld [vmem:[%s531 + $0xc] sm:$0xf]
          %v540 = vunpack.c.l.b16 %v532
          %v541 = vunpack.c.l.b16 %v533
          %v542 = vunpack.c.l.b16 %v534
          %v543 = vunpack.c.l.b16 %v535
          %v544 = vpack.c.b16 %v541, %v540
          %v545 = vpack.c.b16 %v543, %v542
          %548 = vmatprep.subr.bf16.mxu0 0
          %549 = vmatpush1.bf16.msra.mxu0 %v544
          %550 = vmatprep.subr.bf16.mxu0 0
          %551 = vmatpush1.bf16.msra.mxu0 %v545
          %552 = vmatprep.subr.bf16.mxu0 0
          %553 = vmatpush1.bf16.msra.mxu0 0
          %554 = vmatprep.subr.bf16.mxu0 0
          %555 = vmatpush1.bf16.msra.mxu0 0
          %556 = vmatprep.subr.bf16.mxu0 0
          %557 = vmatpush1.bf16.msra.mxu0 0
          %558 = vmatprep.subr.bf16.mxu0 0
          %559 = vmatpush1.bf16.msra.mxu0 0
          %560 = vmatprep.subr.bf16.mxu0 0
          %561 = vmatpush1.bf16.msra.mxu0 0
          %562 = vmatprep.subr.bf16.mxu0 0
          %563 = vmatpush1.bf16.msra.mxu0 0
          %564 = vmatprep.subr.bf16.mxu0 0
          %565 = vmatpush1.bf16.msra.mxu0 0
          %566 = vmatprep.subr.bf16.mxu0 0
          %567 = vmatpush1.bf16.msra.mxu0 0
          %568 = vmatprep.subr.bf16.mxu0 0
          %569 = vmatpush1.bf16.msra.mxu0 0
          %570 = vmatprep.subr.bf16.mxu0 0
          %571 = vmatpush1.bf16.msra.mxu0 0
          %572 = vmatprep.subr.bf16.mxu0 0
          %573 = vmatpush1.bf16.msra.mxu0 0
          %574 = vmatprep.subr.bf16.mxu0 0
          %575 = vmatpush1.bf16.msra.mxu0 0
          %576 = vmatprep.subr.bf16.mxu0 0
          %577 = vmatpush1.bf16.msra.mxu0 0
          %578 = vmatprep.subr.bf16.mxu0 0
          %579 = vmatpush1.bf16.msra.mxu0 0
          %580 = vmatprep.mubr.bf16.mxu0 0
          %581 = vmatmul.mubr.bf16.gmra.mrb[0].mxu0 %v438
          %v582 = vpop.f32.mrb[0].mxu0
          %v583 = vadd.f32 0.0, %v582
          %v584 = vpop.f32.mrb[0].mxu0
          %v585 = vpop.f32.mrb[0].mxu0
          %v586 = vpop.f32.mrb[0].mxu0
          %587 = vdwg.mxu0
          %v588 = vpack.c.bf16 %v583, %v583
          %v590 = vsel %vm485, %v588, 0
          %592 = vmatprep.subr.bf16.mxu0 0
          %593 = vmatpush1.bf16.msra.mxu0 %v590
          %594 = vmatprep.subr.bf16.mxu0 0
          %595 = vmatpush1.bf16.msra.mxu0 0
          %596 = vmatprep.subr.bf16.mxu0 0
          %597 = vmatpush1.bf16.msra.mxu0 0
          %598 = vmatprep.subr.bf16.mxu0 0
          %599 = vmatpush1.bf16.msra.mxu0 0
          %600 = vmatprep.subr.bf16.mxu0 0
          %601 = vmatpush1.bf16.msra.mxu0 0
          %602 = vmatprep.subr.bf16.mxu0 0
          %603 = vmatpush1.bf16.msra.mxu0 0
          %604 = vmatprep.subr.bf16.mxu0 0
          %605 = vmatpush1.bf16.msra.mxu0 0
          %606 = vmatprep.subr.bf16.mxu0 0
          %607 = vmatpush1.bf16.msra.mxu0 0
          %608 = vmatprep.subr.bf16.mxu0 0
          %609 = vmatpush1.bf16.msra.mxu0 0
          %610 = vmatprep.subr.bf16.mxu0 0
          %611 = vmatpush1.bf16.msra.mxu0 0
          %612 = vmatprep.subr.bf16.mxu0 0
          %613 = vmatpush1.bf16.msra.mxu0 0
          %614 = vmatprep.subr.bf16.mxu0 0
          %615 = vmatpush1.bf16.msra.mxu0 0
          %616 = vmatprep.subr.bf16.mxu0 0
          %617 = vmatpush1.bf16.msra.mxu0 0
          %618 = vmatprep.subr.bf16.mxu0 0
          %619 = vmatpush1.bf16.msra.mxu0 0
          %620 = vmatprep.subr.bf16.mxu0 0
          %621 = vmatpush1.bf16.msra.mxu0 0
          %622 = vmatprep.subr.bf16.mxu0 0
          %623 = vmatpush1.bf16.msra.mxu0 0
          %624 = vmatprep.mubr.bf16.mxu0 0
          %625 = vmatmul.mubr.bf16.gmra.mrb[0].mxu0 %v483
          %v626 = vpop.f32.mrb[0].mxu0
          %v627 = vadd.f32 0.0, %v626
          %v628 = vpop.f32.mrb[0].mxu0
          %v629 = vpop.f32.mrb[0].mxu0
          %v630 = vpop.f32.mrb[0].mxu0
          %631 = vdwg.mxu0
          %s632 = scalar_lea.vmem [#allocation2], 8
          %633 = vst.msk [vmem:[%s632] sm:$0xff] %vm529, %v627
          %s634 = scalar_lea.vmem %s2, 32
          %v635 = vld [vmem:[%s634] sm:$0xf]
          %v636 = vld [vmem:[%s634 + $0x4] sm:$0xf]
          %v637 = vld [vmem:[%s634 + $0x8] sm:$0xf]
          %v638 = vld [vmem:[%s634 + $0xc] sm:$0xf]
          %v643 = vunpack.c.l.b16 %v635
          %v644 = vunpack.c.l.b16 %v636
          %v645 = vunpack.c.l.b16 %v637
          %v646 = vunpack.c.l.b16 %v638
          %v647 = vpack.c.b16 %v644, %v643
          %v648 = vpack.c.b16 %v646, %v645
          %651 = vmatprep.subr.bf16.mxu0 0
          %652 = vmatpush1.bf16.msra.mxu0 %v647
          %653 = vmatprep.subr.bf16.mxu0 0
          %654 = vmatpush1.bf16.msra.mxu0 %v648
          %655 = vmatprep.subr.bf16.mxu0 0
          %656 = vmatpush1.bf16.msra.mxu0 0
          %657 = vmatprep.subr.bf16.mxu0 0
          %658 = vmatpush1.bf16.msra.mxu0 0
          %659 = vmatprep.subr.bf16.mxu0 0
          %660 = vmatpush1.bf16.msra.mxu0 0
          %661 = vmatprep.subr.bf16.mxu0 0
          %662 = vmatpush1.bf16.msra.mxu0 0
          %663 = vmatprep.subr.bf16.mxu0 0
          %664 = vmatpush1.bf16.msra.mxu0 0
          %665 = vmatprep.subr.bf16.mxu0 0
          %666 = vmatpush1.bf16.msra.mxu0 0
          %667 = vmatprep.subr.bf16.mxu0 0
          %668 = vmatpush1.bf16.msra.mxu0 0
          %669 = vmatprep.subr.bf16.mxu0 0
          %670 = vmatpush1.bf16.msra.mxu0 0
          %671 = vmatprep.subr.bf16.mxu0 0
          %672 = vmatpush1.bf16.msra.mxu0 0
          %673 = vmatprep.subr.bf16.mxu0 0
          %674 = vmatpush1.bf16.msra.mxu0 0
          %675 = vmatprep.subr.bf16.mxu0 0
          %676 = vmatpush1.bf16.msra.mxu0 0
          %677 = vmatprep.subr.bf16.mxu0 0
          %678 = vmatpush1.bf16.msra.mxu0 0
          %679 = vmatprep.subr.bf16.mxu0 0
          %680 = vmatpush1.bf16.msra.mxu0 0
          %681 = vmatprep.subr.bf16.mxu0 0
          %682 = vmatpush1.bf16.msra.mxu0 0
          %683 = vmatprep.mubr.bf16.mxu0 0
          %684 = vmatmul.mubr.bf16.gmra.mrb[0].mxu0 %v438
          %v685 = vpop.f32.mrb[0].mxu0
          %v686 = vadd.f32 0.0, %v685
          %v687 = vpop.f32.mrb[0].mxu0
          %v688 = vpop.f32.mrb[0].mxu0
          %v689 = vpop.f32.mrb[0].mxu0
          %690 = vdwg.mxu0
          %v691 = vpack.c.bf16 %v686, %v686
          %v693 = vsel %vm485, %v691, 0
          %695 = vmatprep.subr.bf16.mxu0 0
          %696 = vmatpush1.bf16.msra.mxu0 %v693
          %697 = vmatprep.subr.bf16.mxu0 0
          %698 = vmatpush1.bf16.msra.mxu0 0
          %699 = vmatprep.subr.bf16.mxu0 0
          %700 = vmatpush1.bf16.msra.mxu0 0
          %701 = vmatprep.subr.bf16.mxu0 0
          %702 = vmatpush1.bf16.msra.mxu0 0
          %703 = vmatprep.subr.bf16.mxu0 0
          %704 = vmatpush1.bf16.msra.mxu0 0
          %705 = vmatprep.subr.bf16.mxu0 0
          %706 = vmatpush1.bf16.msra.mxu0 0
          %707 = vmatprep.subr.bf16.mxu0 0
          %708 = vmatpush1.bf16.msra.mxu0 0
          %709 = vmatprep.subr.bf16.mxu0 0
          %710 = vmatpush1.bf16.msra.mxu0 0
          %711 = vmatprep.subr.bf16.mxu0 0
          %712 = vmatpush1.bf16.msra.mxu0 0
          %713 = vmatprep.subr.bf16.mxu0 0
          %714 = vmatpush1.bf16.msra.mxu0 0
          %715 = vmatprep.subr.bf16.mxu0 0
          %716 = vmatpush1.bf16.msra.mxu0 0
          %717 = vmatprep.subr.bf16.mxu0 0
          %718 = vmatpush1.bf16.msra.mxu0 0
          %719 = vmatprep.subr.bf16.mxu0 0
          %720 = vmatpush1.bf16.msra.mxu0 0
          %721 = vmatprep.subr.bf16.mxu0 0
          %722 = vmatpush1.bf16.msra.mxu0 0
          %723 = vmatprep.subr.bf16.mxu0 0
          %724 = vmatpush1.bf16.msra.mxu0 0
          %725 = vmatprep.subr.bf16.mxu0 0
          %726 = vmatpush1.bf16.msra.mxu0 0
          %727 = vmatprep.mubr.bf16.mxu0 0
          %728 = vmatmul.mubr.bf16.gmra.mrb[0].mxu0 %v483
          %v729 = vpop.f32.mrb[0].mxu0
          %v730 = vadd.f32 0.0, %v729
          %v731 = vpop.f32.mrb[0].mxu0
          %v732 = vpop.f32.mrb[0].mxu0
          %v733 = vpop.f32.mrb[0].mxu0
          %734 = vdwg.mxu0
          %s735 = scalar_lea.vmem [#allocation2], 16
          %736 = vst.msk [vmem:[%s735] sm:$0xff] %vm529, %v730
        $region60: #{tpu_custom_call.1} parent=55 // pred_fallthru
          _
        %v737 = vld [vmem:[%s395] sm:$0xf]
        %v738 = vld [vmem:[%s400] sm:$0xf]
        %v739 = vld [vmem:[%s400 + $0x4] sm:$0xf]
        %v740 = vld [vmem:[%s400 + $0x8] sm:$0xf]
        %v741 = vld [vmem:[%s400 + $0xc] sm:$0xf]
        %v742 = vld [vmem:[#allocation2] sm:$0xff]
        %v747 = vunpack.c.l.b16 %v738
        %v748 = vunpack.c.l.b16 %v739
        %v749 = vunpack.c.l.b16 %v740
        %v750 = vunpack.c.l.b16 %v741
        %v751 = vpack.c.b16 %v748, %v747
        %v752 = vpack.c.b16 %v750, %v749
        %vm755 = vcmask 261120
        %v757 = vsel %vm755, %v737, 0
        %759 = vmatprep.subr.bf16.mxu0 0
        %760 = vmatpush1.bf16.msra.mxu0 %v751
        %761 = vmatprep.subr.bf16.mxu0 0
        %762 = vmatpush1.bf16.msra.mxu0 %v752
        %763 = vmatprep.subr.bf16.mxu0 0
        %764 = vmatpush1.bf16.msra.mxu0 0
        %765 = vmatprep.subr.bf16.mxu0 0
        %766 = vmatpush1.bf16.msra.mxu0 0
        %767 = vmatprep.subr.bf16.mxu0 0
        %768 = vmatpush1.bf16.msra.mxu0 0
        %769 = vmatprep.subr.bf16.mxu0 0
        %770 = vmatpush1.bf16.msra.mxu0 0
        %771 = vmatprep.subr.bf16.mxu0 0
        %772 = vmatpush1.bf16.msra.mxu0 0
        %773 = vmatprep.subr.bf16.mxu0 0
        %774 = vmatpush1.bf16.msra.mxu0 0
        %775 = vmatprep.subr.bf16.mxu0 0
        %776 = vmatpush1.bf16.msra.mxu0 0
        %777 = vmatprep.subr.bf16.mxu0 0
        %778 = vmatpush1.bf16.msra.mxu0 0
        %779 = vmatprep.subr.bf16.mxu0 0
        %780 = vmatpush1.bf16.msra.mxu0 0
        %781 = vmatprep.subr.bf16.mxu0 0
        %782 = vmatpush1.bf16.msra.mxu0 0
        %783 = vmatprep.subr.bf16.mxu0 0
        %784 = vmatpush1.bf16.msra.mxu0 0
        %785 = vmatprep.subr.bf16.mxu0 0
        %786 = vmatpush1.bf16.msra.mxu0 0
        %787 = vmatprep.subr.bf16.mxu0 0
        %788 = vmatpush1.bf16.msra.mxu0 0
        %789 = vmatprep.subr.bf16.mxu0 0
        %790 = vmatpush1.bf16.msra.mxu0 0
        %791 = vmatprep.mubr.bf16.mxu0 0
        %792 = vmatmul.mubr.bf16.gmra.mrb[0].mxu0 %v757
        %v793 = vpop.f32.mrb[0].mxu0
        %v794 = vadd.f32 %v742, %v793
        %v795 = vpop.f32.mrb[0].mxu0
        %v796 = vpop.f32.mrb[0].mxu0
        %v797 = vpop.f32.mrb[0].mxu0
        %798 = vdwg.mxu0
        %v799 = vmul.f32 %v794, 0.17677669
        %v800 = vpack.c.bf16 %v799, %v799
        %s801 = scalar_lea.vmem %s400, 16
        %v802 = vld [vmem:[%s801] sm:$0xf]
        %v803 = vld [vmem:[%s801 + $0x4] sm:$0xf]
        %v804 = vld [vmem:[%s801 + $0x8] sm:$0xf]
        %v805 = vld [vmem:[%s801 + $0xc] sm:$0xf]
        %s806 = scalar_lea.vmem [#allocation2], 8
        %v807 = vld [vmem:[%s806] sm:$0xff]
        %v812 = vunpack.c.l.b16 %v802
        %v813 = vunpack.c.l.b16 %v803
        %v814 = vunpack.c.l.b16 %v804
        %v815 = vunpack.c.l.b16 %v805
        %v816 = vpack.c.b16 %v813, %v812
        %v817 = vpack.c.b16 %v815, %v814
        %820 = vmatprep.subr.bf16.mxu0 0
        %821 = vmatpush1.bf16.msra.mxu0 %v816
        %822 = vmatprep.subr.bf16.mxu0 0
        %823 = vmatpush1.bf16.msra.mxu0 %v817
        %824 = vmatprep.subr.bf16.mxu0 0
        %825 = vmatpush1.bf16.msra.mxu0 0
        %826 = vmatprep.subr.bf16.mxu0 0
        %827 = vmatpush1.bf16.msra.mxu0 0
        %828 = vmatprep.subr.bf16.mxu0 0
        %829 = vmatpush1.bf16.msra.mxu0 0
        %830 = vmatprep.subr.bf16.mxu0 0
        %831 = vmatpush1.bf16.msra.mxu0 0
        %832 = vmatprep.subr.bf16.mxu0 0
        %833 = vmatpush1.bf16.msra.mxu0 0
        %834 = vmatprep.subr.bf16.mxu0 0
        %835 = vmatpush1.bf16.msra.mxu0 0
        %836 = vmatprep.subr.bf16.mxu0 0
        %837 = vmatpush1.bf16.msra.mxu0 0
        %838 = vmatprep.subr.bf16.mxu0 0
        %839 = vmatpush1.bf16.msra.mxu0 0
        %840 = vmatprep.subr.bf16.mxu0 0
        %841 = vmatpush1.bf16.msra.mxu0 0
        %842 = vmatprep.subr.bf16.mxu0 0
        %843 = vmatpush1.bf16.msra.mxu0 0
        %844 = vmatprep.subr.bf16.mxu0 0
        %845 = vmatpush1.bf16.msra.mxu0 0
        %846 = vmatprep.subr.bf16.mxu0 0
        %847 = vmatpush1.bf16.msra.mxu0 0
        %848 = vmatprep.subr.bf16.mxu0 0
        %849 = vmatpush1.bf16.msra.mxu0 0
        %850 = vmatprep.subr.bf16.mxu0 0
        %851 = vmatpush1.bf16.msra.mxu0 0
        %852 = vmatprep.mubr.bf16.mxu0 0
        %853 = vmatmul.mubr.bf16.gmra.mrb[0].mxu0 %v757
        %v854 = vpop.f32.mrb[0].mxu0
        %v855 = vadd.f32 %v807, %v854
        %v856 = vpop.f32.mrb[0].mxu0
        %v857 = vpop.f32.mrb[0].mxu0
        %v858 = vpop.f32.mrb[0].mxu0
        %859 = vdwg.mxu0
        %v860 = vpack.c.bf16 %v855, %v855
        %s861 = scalar_lea.vmem %s400, 32
        %v862 = vld [vmem:[%s861] sm:$0xf]
        %v863 = vld [vmem:[%s861 + $0x4] sm:$0xf]
        %v864 = vld [vmem:[%s861 + $0x8] sm:$0xf]
        %v865 = vld [vmem:[%s861 + $0xc] sm:$0xf]
        %s866 = scalar_lea.vmem [#allocation2], 16
        %v867 = vld [vmem:[%s866] sm:$0xff]
        %v872 = vunpack.c.l.b16 %v862
        %v873 = vunpack.c.l.b16 %v863
        %v874 = vunpack.c.l.b16 %v864
        %v875 = vunpack.c.l.b16 %v865
        %v876 = vpack.c.b16 %v873, %v872
        %v877 = vpack.c.b16 %v875, %v874
        %880 = vmatprep.subr.bf16.mxu0 0
        %881 = vmatpush1.bf16.msra.mxu0 %v876
        %882 = vmatprep.subr.bf16.mxu0 0
        %883 = vmatpush1.bf16.msra.mxu0 %v877
        %884 = vmatprep.subr.bf16.mxu0 0
        %885 = vmatpush1.bf16.msra.mxu0 0
        %886 = vmatprep.subr.bf16.mxu0 0
        %887 = vmatpush1.bf16.msra.mxu0 0
        %888 = vmatprep.subr.bf16.mxu0 0
        %889 = vmatpush1.bf16.msra.mxu0 0
        %890 = vmatprep.subr.bf16.mxu0 0
        %891 = vmatpush1.bf16.msra.mxu0 0
        %892 = vmatprep.subr.bf16.mxu0 0
        %893 = vmatpush1.bf16.msra.mxu0 0
        %894 = vmatprep.subr.bf16.mxu0 0
        %895 = vmatpush1.bf16.msra.mxu0 0
        %896 = vmatprep.subr.bf16.mxu0 0
        %897 = vmatpush1.bf16.msra.mxu0 0
        %898 = vmatprep.subr.bf16.mxu0 0
        %899 = vmatpush1.bf16.msra.mxu0 0
        %900 = vmatprep.subr.bf16.mxu0 0
        %901 = vmatpush1.bf16.msra.mxu0 0
        %902 = vmatprep.subr.bf16.mxu0 0
        %903 = vmatpush1.bf16.msra.mxu0 0
        %904 = vmatprep.subr.bf16.mxu0 0
        %905 = vmatpush1.bf16.msra.mxu0 0
        %906 = vmatprep.subr.bf16.mxu0 0
        %907 = vmatpush1.bf16.msra.mxu0 0
        %908 = vmatprep.subr.bf16.mxu0 0
        %909 = vmatpush1.bf16.msra.mxu0 0
        %910 = vmatprep.subr.bf16.mxu0 0
        %911 = vmatpush1.bf16.msra.mxu0 0
        %912 = vmatprep.mubr.bf16.mxu0 0
        %913 = vmatmul.mubr.bf16.gmra.mrb[0].mxu0 %v757
        %v914 = vpop.f32.mrb[0].mxu0
        %v915 = vadd.f32 %v867, %v914
        %v916 = vpop.f32.mrb[0].mxu0
        %v917 = vpop.f32.mrb[0].mxu0
        %v918 = vpop.f32.mrb[0].mxu0
        %919 = vdwg.mxu0
        %v920 = vpack.c.bf16 %v915, %v915
        %v921 = vld [vmem:[%s409] sm:$0xf]
        %v922 = vld [vmem:[%s409 + $0x4] sm:$0xf]
        %v923 = vld [vmem:[%s412] sm:$0x1]
        %v925 = vlaneseq
        %v926 = vshrl.u32 %v925, 7
        %v927 = vsub.s32 0, %v926
        %v928 = vrot.slane %v923, %v927
        %v932 = vunpack.c.l.b16 %v921
        %v933 = vunpack.c.l.b16 %v922
        %v934 = vpack.c.b16 %v933, %v932
        %vm935 = vcmask 64512
        %v937 = vsel %vm935, %v800, 0
        %v940 = vsel %vm935, %v934, 0
        %942 = vmatprep.subr.bf16.mxu0 0
        %943 = vmatpush1.bf16.xpose.msra.mxu0 %v940
        %944 = vmatprep.subr.bf16.mxu0 0
        %945 = vmatpush1.bf16.xpose.msra.mxu0 0
        %946 = vmatprep.subr.bf16.mxu0 0
        %947 = vmatpush1.bf16.xpose.msra.mxu0 0
        %948 = vmatprep.subr.bf16.mxu0 0
        %949 = vmatpush1.bf16.xpose.msra.mxu0 0
        %950 = vmatprep.subr.bf16.mxu0 0
        %951 = vmatpush1.bf16.xpose.msra.mxu0 0
        %952 = vmatprep.subr.bf16.mxu0 0
        %953 = vmatpush1.bf16.xpose.msra.mxu0 0
        %954 = vmatprep.subr.bf16.mxu0 0
        %955 = vmatpush1.bf16.xpose.msra.mxu0 0
        %956 = vmatprep.subr.bf16.mxu0 0
        %957 = vmatpush1.bf16.xpose.msra.mxu0 0
        %958 = vmatprep.subr.bf16.mxu0 0
        %959 = vmatpush1.bf16.xpose.msra.mxu0 0
        %960 = vmatprep.subr.bf16.mxu0 0
        %961 = vmatpush1.bf16.xpose.msra.mxu0 0
        %962 = vmatprep.subr.bf16.mxu0 0
        %963 = vmatpush1.bf16.xpose.msra.mxu0 0
        %964 = vmatprep.subr.bf16.mxu0 0
        %965 = vmatpush1.bf16.xpose.msra.mxu0 0
        %966 = vmatprep.subr.bf16.mxu0 0
        %967 = vmatpush1.bf16.xpose.msra.mxu0 0
        %968 = vmatprep.subr.bf16.mxu0 0
        %969 = vmatpush1.bf16.xpose.msra.mxu0 0
        %970 = vmatprep.subr.bf16.mxu0 0
        %971 = vmatpush1.bf16.xpose.msra.mxu0 0
        %972 = vmatprep.subr.bf16.mxu0 0
        %973 = vmatpush1.bf16.xpose.msra.mxu0 0
        %974 = vmatprep.mubr.bf16.mxu0 0
        %975 = vmatmul.mubr.bf16.gmra.mrb[0].mxu0 %v937
        %v976 = vpop.f32.mrb[0].mxu0
        %v977 = vadd.f32 %v928, %v976
        %v978 = vpop.f32.mrb[0].mxu0
        %v979 = vpop.f32.mrb[0].mxu0
        %v980 = vpop.f32.mrb[0].mxu0
        %981 = vdwg.mxu0
        %v982 = vld [vmem:[%s7] sm:$0xff]
        %v983 = vmul.f32 %v977, %v982
        %v984 = vpack.c.bf16 %v983, %v983
        %v985 = vld [vmem:[%s8] sm:$0xf]
        %v986 = vld [vmem:[%s8 + $0x4] sm:$0xf]
        %v989 = vunpack.c.l.b16 %v985
        %v990 = vunpack.c.l.b16 %v986
        %v991 = vpack.c.b16 %v990, %v989
        %vm993 = vcmask 130048
        %v995 = vsel %vm993, %v984, 0
        %997 = vmatprep.subr.bf16.mxu0 0
        %998 = vmatpush1.bf16.msra.mxu0 %v991
        %999 = vmatprep.subr.bf16.mxu0 0
        %1000 = vmatpush1.bf16.msra.mxu0 0
        %1001 = vmatprep.subr.bf16.mxu0 0
        %1002 = vmatpush1.bf16.msra.mxu0 0
        %1003 = vmatprep.subr.bf16.mxu0 0
        %1004 = vmatpush1.bf16.msra.mxu0 0
        %1005 = vmatprep.subr.bf16.mxu0 0
        %1006 = vmatpush1.bf16.msra.mxu0 0
        %1007 = vmatprep.subr.bf16.mxu0 0
        %1008 = vmatpush1.bf16.msra.mxu0 0
        %1009 = vmatprep.subr.bf16.mxu0 0
        %1010 = vmatpush1.bf16.msra.mxu0 0
        %1011 = vmatprep.subr.bf16.mxu0 0
        %1012 = vmatpush1.bf16.msra.mxu0 0
        %1013 = vmatprep.subr.bf16.mxu0 0
        %1014 = vmatpush1.bf16.msra.mxu0 0
        %1015 = vmatprep.subr.bf16.mxu0 0
        %1016 = vmatpush1.bf16.msra.mxu0 0
        %1017 = vmatprep.subr.bf16.mxu0 0
        %1018 = vmatpush1.bf16.msra.mxu0 0
        %1019 = vmatprep.subr.bf16.mxu0 0
        %1020 = vmatpush1.bf16.msra.mxu0 0
        %1021 = vmatprep.subr.bf16.mxu0 0
        %1022 = vmatpush1.bf16.msra.mxu0 0
        %1023 = vmatprep.subr.bf16.mxu0 0
        %1024 = vmatpush1.bf16.msra.mxu0 0
        %1025 = vmatprep.subr.bf16.mxu0 0
        %1026 = vmatpush1.bf16.msra.mxu0 0
        %1027 = vmatprep.subr.bf16.mxu0 0
        %1028 = vmatpush1.bf16.msra.mxu0 0
        %1029 = vmatprep.mubr.bf16.mxu0 0
        %1030 = vmatmul.mubr.bf16.gmra.mrb[0].mxu0 %v995
        %v1031 = vpop.f32.mrb[0].mxu0
        %v1032 = vadd.f32 0.0, %v1031
        %v1033 = vpop.f32.mrb[0].mxu0
        %v1034 = vpop.f32.mrb[0].mxu0
        %v1035 = vpop.f32.mrb[0].mxu0
        %1036 = vdwg.mxu0
        %v1038 = vsel %vm935, %v860, 0
        %1040 = vmatprep.subr.bf16.mxu0 0
        %1041 = vmatpush1.bf16.xpose.msra.mxu0 %v1038
        %1042 = vmatprep.subr.bf16.mxu0 0
        %1043 = vmatpush1.bf16.xpose.msra.mxu0 0
        %1044 = vmatprep.subr.bf16.mxu0 0
        %1045 = vmatpush1.bf16.xpose.msra.mxu0 0
        %1046 = vmatprep.subr.bf16.mxu0 0
        %1047 = vmatpush1.bf16.xpose.msra.mxu0 0
        %1048 = vmatprep.subr.bf16.mxu0 0
        %1049 = vmatpush1.bf16.xpose.msra.mxu0 0
        %1050 = vmatprep.subr.bf16.mxu0 0
        %1051 = vmatpush1.bf16.xpose.msra.mxu0 0
        %1052 = vmatprep.subr.bf16.mxu0 0
        %1053 = vmatpush1.bf16.xpose.msra.mxu0 0
        %1054 = vmatprep.subr.bf16.mxu0 0
        %1055 = vmatpush1.bf16.xpose.msra.mxu0 0
        %1056 = vmatprep.subr.bf16.mxu0 0
        %1057 = vmatpush1.bf16.xpose.msra.mxu0 0
        %1058 = vmatprep.subr.bf16.mxu0 0
        %1059 = vmatpush1.bf16.xpose.msra.mxu0 0
        %1060 = vmatprep.subr.bf16.mxu0 0
        %1061 = vmatpush1.bf16.xpose.msra.mxu0 0
        %1062 = vmatprep.subr.bf16.mxu0 0
        %1063 = vmatpush1.bf16.xpose.msra.mxu0 0
        %1064 = vmatprep.subr.bf16.mxu0 0
        %1065 = vmatpush1.bf16.xpose.msra.mxu0 0
        %1066 = vmatprep.subr.bf16.mxu0 0
        %1067 = vmatpush1.bf16.xpose.msra.mxu0 0
        %1068 = vmatprep.subr.bf16.mxu0 0
        %1069 = vmatpush1.bf16.xpose.msra.mxu0 0
        %1070 = vmatprep.subr.bf16.mxu0 0
        %1071 = vmatpush1.bf16.xpose.msra.mxu0 0
        %1072 = vmatprep.mubr.bf16.mxu0 0
        %1073 = vmatmul.mubr.bf16.gmra.mrb[0].mxu0 %v937
        %v1074 = vpop.f32.mrb[0].mxu0
        %v1075 = vadd.f32 %v1032, %v1074
        %v1076 = vpop.f32.mrb[0].mxu0
        %v1077 = vpop.f32.mrb[0].mxu0
        %v1078 = vpop.f32.mrb[0].mxu0
        %1079 = vdwg.mxu0
        %v1080 = vsel %vm935, %v1075, -inf
        %1081 = vmax.xlane.f32.xlu0 %v1080
        %v1082 = vpop.xlane.xlu0 %1081
        %v1083 = vsub.f32 %v1075, %v1082
        %v1084 = vmul.f32 %v1083, 1.442695
        %v1085 = vpow.pop %v1084
        %v1086 = vsel %vm935, %v1085, 0.0
        %1087 = vadd.xlane.f32.xlu0 %v1086
        %v1088 = vpop.xlane.xlu0 %1087
        %v1089 = vrcp.pop %v1088
        %v1090 = vmul.f32 %v1085, %v1089
        %v1091 = vpack.c.bf16 %v1090, %v1090
        %v1093 = vsel %vm935, %v1091, 0
        %vm1095 = vcmask 1043456
        %v1097 = vsel %vm1095, %v920, 0
        %1099 = vmatprep.subr.bf16.mxu0 0
        %1100 = vmatpush1.bf16.msra.mxu0 %v1097
        %1101 = vmatprep.subr.bf16.mxu0 0
        %1102 = vmatpush1.bf16.msra.mxu0 0
        %1103 = vmatprep.subr.bf16.mxu0 0
        %1104 = vmatpush1.bf16.msra.mxu0 0
        %1105 = vmatprep.subr.bf16.mxu0 0
        %1106 = vmatpush1.bf16.msra.mxu0 0
        %1107 = vmatprep.subr.bf16.mxu0 0
        %1108 = vmatpush1.bf16.msra.mxu0 0
        %1109 = vmatprep.subr.bf16.mxu0 0
        %1110 = vmatpush1.bf16.msra.mxu0 0
        %1111 = vmatprep.subr.bf16.mxu0 0
        %1112 = vmatpush1.bf16.msra.mxu0 0
        %1113 = vmatprep.subr.bf16.mxu0 0
        %1114 = vmatpush1.bf16.msra.mxu0 0
        %1115 = vmatprep.subr.bf16.mxu0 0
        %1116 = vmatpush1.bf16.msra.mxu0 0
        %1117 = vmatprep.subr.bf16.mxu0 0
        %1118 = vmatpush1.bf16.msra.mxu0 0
        %1119 = vmatprep.subr.bf16.mxu0 0
        %1120 = vmatpush1.bf16.msra.mxu0 0
        %1121 = vmatprep.subr.bf16.mxu0 0
        %1122 = vmatpush1.bf16.msra.mxu0 0
        %1123 = vmatprep.subr.bf16.mxu0 0
        %1124 = vmatpush1.bf16.msra.mxu0 0
        %1125 = vmatprep.subr.bf16.mxu0 0
        %1126 = vmatpush1.bf16.msra.mxu0 0
        %1127 = vmatprep.subr.bf16.mxu0 0
        %1128 = vmatpush1.bf16.msra.mxu0 0
        %1129 = vmatprep.subr.bf16.mxu0 0
        %1130 = vmatpush1.bf16.msra.mxu0 0
        %1131 = vmatprep.mubr.bf16.mxu0 0
        %1132 = vmatmul.mubr.bf16.gmra.mrb[0].mxu0 %v1093
        %v1133 = vpop.f32.mrb[0].mxu0
        %v1134 = vadd.f32 0.0, %v1133
        %v1135 = vpop.f32.mrb[0].mxu0
        %v1136 = vpop.f32.mrb[0].mxu0
        %v1137 = vpop.f32.mrb[0].mxu0
        %1138 = vdwg.mxu0
        %1139 = vst.msk [vmem:[%s391] sm:$0xff] %vm935, %v1134
        %s1140 = sand.u32 %s259, 1
        %s1141 = scalar_lea.sflag [#allocation4], %s1140
        %s1142 = sand.u32 %s259, 1
        %s1143 = smul.addr %s1142, 8
        %s1144 = scalar_lea.vmem [#allocation3], %s1143
        // Predicated region
        $region61: #{tpu_custom_call.1} parent=55 // pred_check
          %p1145 = pneg %p269
        $region62: #{tpu_custom_call.1} parent=55 // pred_check_branch
          %1147 = sbr.rel (%p1145) target = $region64
        $region63: #{tpu_custom_call.1} parent=55 // pred_region
          %s1149 = ssub.s32 128, 128
          %1150 = vsyncadd %s1141, %s1149
          %s1151 = smul.addr %s27, 4
          %s1152 = sadd.s32 %s28, %s1151
          %s1153 = smul.addr %s1152, 128
          %s1154 = scalar_lea.hbm %s9, %s1153
          %s1156 = sshll.u32 %s1144, 4
          %s1157 = int_to_ptr.vmem [resolvable:$true] %s1156
          %1159 = dma.vmem_to_hbm [thread:$0]  %s1157, 128, %s1154, %s1141
        $region64: #{tpu_custom_call.1} parent=55 // pred_fallthru
          _
      $region56: #{tpu_custom_call.1} parent=5 // pred_fallthru
        _
      %p1160 = scmp.le.s32.totalorder 2, %s18
      // Predicated region
      $region65: #{tpu_custom_call.1} parent=5 // pred_check
        %p1161 = pneg %p1160
      $region66: #{tpu_custom_call.1} parent=5 // pred_check_branch
        %1163 = sbr.rel (%p1161) target = $region68
      $region67: #{tpu_custom_call.1} parent=5 // pred_region
        %s1164 = ssub.s32 %s18, 2
        // Predicated region
        $region69: #{tpu_custom_call.1} parent=67 // pred_check
          %p1165 = pneg %p275
        $region70: #{tpu_custom_call.1} parent=67 // pred_check_branch
          %1167 = sbr.rel (%p1165) target = $region72
        $region71: #{tpu_custom_call.1} parent=67 // pred_region
          %s1168 = sand.u32 %s260, 1
          %s1169 = scalar_lea.sflag [#allocation4], %s1168
          %s1170 = sand.u32 %s260, 1
          %s1171 = smul.addr %s1170, 8
          %s1172 = scalar_lea.vmem [#allocation3], %s1171
          %1173 = dma.done %s1169, 128
        $region72: #{tpu_custom_call.1} parent=67 // pred_fallthru
          _
      $region68: #{tpu_custom_call.1} parent=5 // pred_fallthru
        _
    $region6: #{tpu_custom_call.1} parent=1 // loop_footer
      %s22 = sadd.s32 1, %s18
    $region7: #{tpu_custom_call.1} parent=1 // loop_footer_branch
      %17 = sbr.rel target = $region3
    $region8: #{tpu_custom_call.1} parent=1 // loop_exit
      _
    %1174 = vsyncpa [#allocation4], 1
    %s1175 = scalar_lea.sflag [#allocation4], 1
    %1176 = vsyncpa %s1175, 1

</llo_original>
